<compile_context>
chip_gen: v6e
topology: v6e:2x2x1
jax: 0.10.0
libtpu: 0.0.40
codegen_flags: <defaults>
</compile_context>

<pallas_src>
import functools

import jax
import jax.numpy as jnp
import numpy as np
from jax import lax
from jax.experimental import pallas as pl
from jax.experimental.pallas import tpu as pltpu

EPS = 1e-5


# --------------------------------------------------------------------------- kernels

def _conv_stats_kernel(x_ref, scale_ref, shift_ref, w_ref,
                       y_ref, sum_ref, ssq_ref, *, width, apply_relu):
    """One image per grid step, (C, M=H*W) layout with M on lanes.

    a = [relu](x * scale + shift)       (scale/shift = previous BN affine, or 1/0)
    y = conv3x3(a)                      (single (C,9C)x(9C,M) MXU matmul, lane-dense out)
    emits y (bf16) and per-image BN partial sums (f32).
    """
    _, C, M = x_ref.shape

    # Element-wise pre-normalization in f32 (identity for pass 1, BN1 affine for pass 2).
    a = x_ref[0].astype(jnp.float32) * scale_ref[...] + shift_ref[...]
    if apply_relu:
        a = jnp.maximum(a, 0.0)

    # Column validity masks for the dx = +/-1 taps.  Row (dy) boundaries are handled by
    # the zero fill of the lane shifts alone (out-of-image flat indices fall off the ends).
    w_idx = lax.broadcasted_iota(jnp.int32, (1, M), 1) % width
    ok_left = w_idx >= 1                # tap reads column w-1
    ok_right = w_idx <= width - 2       # tap reads column w+1

    # Build the transposed im2col patch (9C, M) as 9 lane-shifted copies of `a`.
    taps = []
    for dy in (-1, 0, 1):
        for dx in (-1, 0, 1):
            k = dy * width + dx         # shifted[p] = a[p + k] (zero outside [0, M))
            if k > 0:
                s = jnp.concatenate(
                    [a[:, k:], jnp.zeros((C, k), jnp.float32)], axis=1)
            elif k < 0:
                s = jnp.concatenate(
                    [jnp.zeros((C, -k), jnp.float32), a[:, :M + k]], axis=1)
            else:
                s = a
            if dx == -1:
                s = jnp.where(ok_left, s, 0.0)
            elif dx == 1:
                s = jnp.where(ok_right, s, 0.0)
            taps.append(s)
    patch_t = jnp.concatenate(taps, axis=0).astype(jnp.bfloat16)            # (9C, M)

    # One MXU matmul: (C, 9C) x (9C, M) -> (C, M), f32 accumulation, lane-dense output.
    # (Conv bias intentionally omitted -- BatchNorm's mean subtraction cancels it exactly.)
    y = jnp.dot(w_ref[...], patch_t, preferred_element_type=jnp.float32)    # (C, M)

    y_ref[0] = y.astype(y_ref.dtype)
    sum_ref[0] = jnp.sum(y, axis=1, keepdims=True)          # per-image channel sums
    ssq_ref[0] = jnp.sum(y * y, axis=1, keepdims=True)      # per-image channel sums of sq.


# --------------------------------------------------------------------------- wrappers

def _vmem_cap_bytes():
    try:
        cap = int(pltpu.get_tpu_info().vmem_capacity_bytes)
    except Exception:
        cap = 128 << 20
    # Leave headroom for compiler-internal scratch and double-buffered blocks:
    # ~48 MiB on v7x (64 MiB physical), ~96 MiB on v5e/v6e (128 MiB physical).
    return (cap * 3) // 4


def _vmem_limit_bytes(*block_nbytes):
    est = 2 * sum(block_nbytes) + (8 << 20)        # double-buffered blocks + headroom
    return int(min(max(est, 16 << 20), _vmem_cap_bytes()))


def _conv_stats_pass(x_ncm, scale, shift, w9t, *, width, apply_relu):
    N, C, M = x_ncm.shape
    img_in = pl.BlockSpec((1, C, M), lambda n: (n, 0, 0))
    img_out = pl.BlockSpec((1, C, M), lambda n: (n, 0, 0))
    cvec = pl.BlockSpec((C, 1), lambda n: (0, 0))
    wspec = pl.BlockSpec((C, 9 * C), lambda n: (0, 0))
    stat = pl.BlockSpec((1, C, 1), lambda n: (n, 0, 0))

    limit = _vmem_limit_bytes(
        C * M * x_ncm.dtype.itemsize,        # input block
        C * M * 2,                           # bf16 output block
        9 * C * M * 4 + 9 * C * M * 2,       # f32 taps + bf16 patch temporaries
        2 * C * M * 4,                       # activation + matmul accumulator
    )

    return pl.pallas_call(
        functools.partial(_conv_stats_kernel, width=width, apply_relu=apply_relu),
        out_shape=(
            jax.ShapeDtypeStruct((N, C, M), jnp.bfloat16),   # raw conv output (pre-BN)
            jax.ShapeDtypeStruct((N, C, 1), jnp.float32),    # per-image channel sums
            jax.ShapeDtypeStruct((N, C, 1), jnp.float32),    # per-image channel sums of sq.
        ),
        grid_spec=pltpu.PrefetchScalarGridSpec(
            num_scalar_prefetch=0,
            grid=(N,),
            in_specs=[img_in, cvec, cvec, wspec],
            out_specs=[img_out, stat, stat],
        ),
        compiler_params=pltpu.CompilerParams(
            dimension_semantics=("parallel",),
            vmem_limit_bytes=limit,
        ),
    )(x_ncm, scale, shift, w9t)


def _finalize_bn(psum, pssq, gamma, beta, count):
    """Fold per-image partial sums into the BN affine (scale, shift), both (C, 1)."""
    s = jnp.sum(psum, axis=0)                                  # (C, 1)
    ss = jnp.sum(pssq, axis=0)                                 # (C, 1)
    mean = s / count
    var = jnp.maximum(ss / count - mean * mean, 0.0)           # biased variance (training BN)
    inv = lax.rsqrt(var + EPS)
    scale = gamma.reshape(-1, 1) * inv
    shift = beta.reshape(-1, 1) - mean * scale
    return scale, shift


def residual_block_nchw(x_nchw, params):
    """x_nchw: (N, C, H, W) float32 (PyTorch layout).  Returns x + block(x)."""
    N, C, H, W = x_nchw.shape
    M = H * W
    count = float(N * M)

    x_ncm = x_nchw.reshape(N, C, M)                            # free reshape, no transpose
    # HWIO (3,3,Cin,Cout) -> (Cout, 9*Cin), column order (ky, kx, c_in); bf16 for the MXU.
    w1t = jnp.transpose(params["w1"], (3, 0, 1, 2)).reshape(C, 9 * C).astype(jnp.bfloat16)
    w2t = jnp.transpose(params["w2"], (3, 0, 1, 2)).reshape(C, 9 * C).astype(jnp.bfloat16)
    one = jnp.ones((C, 1), jnp.float32)
    zero = jnp.zeros((C, 1), jnp.float32)

    # pass 1: conv1 + BN1 partial stats
    y1, s1, ss1 = _conv_stats_pass(x_ncm, one, zero, w1t, width=W, apply_relu=False)
    scale1, shift1 = _finalize_bn(s1, ss1, params["g1"], params["be1"], count)

    # pass 2: bn1 affine + relu + conv2 + BN2 partial stats
    y2, s2, ss2 = _conv_stats_pass(y1, scale1, shift1, w2t, width=W, apply_relu=True)
    scale2, shift2 = _finalize_bn(s2, ss2, params["g2"], params["be2"], count)

    # pass 3: bn2 affine + residual add -- plain jnp so XLA fuses it with neighbours.
    out = x_ncm.astype(jnp.float32) + y2.astype(jnp.float32) * scale2 + shift2
    return out.reshape(N, C, H, W).astype(x_nchw.dtype)


# --------------------------------------------------------------------------- params & reference

def init_params(key, C):
    ks = jax.random.split(key, 4)
    scale = 1.0 / np.sqrt(C * 9)
    return {
        # conv weights stored HWIO: (3, 3, C_in, C_out); biases only used by the reference
        # (BatchNorm cancels them exactly, so the kernel path drops them).
        "w1": jax.random.normal(ks[0], (3, 3, C, C), jnp.float32) * scale,
        "b1": jax.random.normal(ks[1], (C,), jnp.float32) * 0.1,
        "g1": jnp.ones((C,), jnp.float32),
        "be1": jnp.zeros((C,), jnp.float32),
        "w2": jax.random.normal(ks[2], (3, 3, C, C), jnp.float32) * scale,
        "b2": jax.random.normal(ks[3], (C,), jnp.float32) * 0.1,
        "g2": jnp.ones((C,), jnp.float32),
        "be2": jnp.zeros((C,), jnp.float32),
    }


def reference_nchw(x_nchw, params):
    x = jnp.transpose(x_nchw, (0, 2, 3, 1))

    def conv(x, w, b):
        y = lax.conv_general_dilated(
            x, w, window_strides=(1, 1), padding="SAME",
            dimension_numbers=("NHWC", "HWIO", "NHWC"))
        return y + b

    def bn(y, g, be):
        mean = y.mean(axis=(0, 1, 2), keepdims=True)
        var = ((y - mean) ** 2).mean(axis=(0, 1, 2), keepdims=True)
        return (y - mean) / jnp.sqrt(var + EPS) * g + be

    y = conv(x, params["w1"], params["b1"])
    y = jnp.maximum(bn(y, params["g1"], params["be1"]), 0.0)
    y = conv(y, params["w2"], params["b2"])
    y = bn(y, params["g2"], params["be2"])
    return jnp.transpose(x + y, (0, 3, 1, 2))


if __name__ == "__main__":
    N, C, H, W = 2, 4, 16, 16
    key = jax.random.PRNGKey(0)
    kx, kp = jax.random.split(key)

    x_nchw = jax.random.normal(kx, (N, C, H, W), jnp.float32)   # PyTorch-style NCHW input
    params = init_params(kp, C)

    out = jax.jit(residual_block_nchw)(x_nchw, params)
    jax.block_until_ready(out)

    ref = reference_nchw(x_nchw, params)
    # bf16 intermediates (y1/y2 + matmul operands) vs an all-f32 reference -> looser tol.
    np.testing.assert_allclose(np.asarray(out), np.asarray(ref), rtol=5e-2, atol=5e-2)
    print("KERNEL_OK")
</pallas_src>

<mosaic_0001>
module attributes {stable_mosaic.version = 11 : i64} {
  func.func @_conv_stats_kernel(%arg0: i32, %arg1: memref<1x4x256xf32, #tpu.memory_space<vmem>>, %arg2: memref<4x1xf32, #tpu.memory_space<vmem>>, %arg3: memref<4x1xf32, #tpu.memory_space<vmem>>, %arg4: memref<4x36xbf16, #tpu.memory_space<vmem>>, %arg5: memref<1x4x256xbf16, #tpu.memory_space<vmem>>, %arg6: memref<1x4x1xf32, #tpu.memory_space<vmem>>, %arg7: memref<1x4x1xf32, #tpu.memory_space<vmem>>) attributes {dimension_semantics = [#tpu.dimension_semantics<parallel>], iteration_bounds = array<i64: 2>, scalar_prefetch = 0 : i64, scratch_operands = 0 : i64, tpu.core_type = #tpu.core_type<tc>, window_params = [{transform_indices = @transform_0, window_bounds = array<i64: 1, 4, 256>}, {pipeline_mode = #tpu.pipeline_mode<synchronous>, transform_indices = @transform_1, window_bounds = array<i64: 4, 1>}, {pipeline_mode = #tpu.pipeline_mode<synchronous>, transform_indices = @transform_2, window_bounds = array<i64: 4, 1>}, {pipeline_mode = #tpu.pipeline_mode<synchronous>, transform_indices = @transform_3, window_bounds = array<i64: 4, 36>}, {transform_indices = @transform_4, window_bounds = array<i64: 1, 4, 256>}, {transform_indices = @transform_5, window_bounds = array<i64: 1, 4, 1>}, {transform_indices = @transform_6, window_bounds = array<i64: 1, 4, 1>}]} {
    %c0 = arith.constant 0 : index
    %c0_0 = arith.constant 0 : index
    %c0_1 = arith.constant 0 : index
    %0 = vector.load %arg1[%c0, %c0_0, %c0_1] : memref<1x4x256xf32, #tpu.memory_space<vmem>>, vector<1x4x256xf32>
    %1 = vector.shape_cast %0 : vector<1x4x256xf32> to vector<4x256xf32>
    %c0_2 = arith.constant 0 : index
    %c0_3 = arith.constant 0 : index
    %2 = vector.load %arg2[%c0_2, %c0_3] : memref<4x1xf32, #tpu.memory_space<vmem>>, vector<4x1xf32>
    %3 = vector.broadcast %2 : vector<4x1xf32> to vector<4x256xf32>
    %4 = arith.mulf %1, %3 : vector<4x256xf32>
    %c0_4 = arith.constant 0 : index
    %c0_5 = arith.constant 0 : index
    %5 = vector.load %arg3[%c0_4, %c0_5] : memref<4x1xf32, #tpu.memory_space<vmem>>, vector<4x1xf32>
    %6 = vector.broadcast %5 : vector<4x1xf32> to vector<4x256xf32>
    %7 = arith.addf %4, %6 : vector<4x256xf32>
    %8 = tpu.iota {dimensions = array<i32: 1>} : vector<1x256xi32>
    %c16_i32 = arith.constant 16 : i32
    %c0_i32 = arith.constant 0 : i32
    %9 = arith.cmpi eq, %c16_i32, %c0_i32 : i32
    %c1_i32 = arith.constant 1 : i32
    %10 = arith.select %9, %c1_i32, %c16_i32 : i32
    %11 = vector.broadcast %10 : i32 to vector<1x256xi32>
    %12 = arith.remsi %8, %11 : vector<1x256xi32>
    %c0_i32_6 = arith.constant 0 : i32
    %13 = vector.broadcast %c0_i32_6 : i32 to vector<1x256xi32>
    %14 = arith.cmpi ne, %12, %13 : vector<1x256xi32>
    %c0_i32_7 = arith.constant 0 : i32
    %15 = vector.broadcast %c0_i32_7 : i32 to vector<1x256xi32>
    %16 = arith.cmpi slt, %12, %15 : vector<1x256xi32>
    %c0_i32_8 = arith.constant 0 : i32
    %17 = arith.cmpi slt, %10, %c0_i32_8 : i32
    %18 = vector.broadcast %17 : i1 to vector<1x256xi1>
    %19 = vector.broadcast %18 : vector<1x256xi1> to vector<1x256xi1>
    %20 = arith.xori %16, %19 : vector<1x256xi1>
    %21 = arith.andi %20, %14 : vector<1x256xi1>
    %22 = vector.broadcast %10 : i32 to vector<1x256xi32>
    %23 = arith.addi %12, %22 : vector<1x256xi32>
    %24 = arith.select %21, %23, %12 : vector<1x256xi1>, vector<1x256xi32>
    %c1_i32_9 = arith.constant 1 : i32
    %25 = vector.broadcast %c1_i32_9 : i32 to vector<1x256xi32>
    %26 = arith.cmpi sge, %24, %25 : vector<1x256xi32>
    %c14_i32 = arith.constant 14 : i32
    %27 = vector.broadcast %c14_i32 : i32 to vector<1x256xi32>
    %28 = arith.cmpi sle, %24, %27 : vector<1x256xi32>
    %cst = arith.constant 0.000000e+00 : f32
    %29 = vector.broadcast %cst : f32 to vector<4x17xf32>
    %30 = vector.extract_strided_slice %7 {offsets = [0, 0], sizes = [4, 239], strides = [1, 1]} : vector<4x256xf32> to vector<4x239xf32>
    %31 = tpu.concatenate %29, %30 in 1 : vector<4x17xf32>, vector<4x239xf32> -> vector<4x256xf32>
    %cst_10 = arith.constant 0.000000e+00 : f32
    %32 = vector.shape_cast %26 : vector<1x256xi1> to vector<1x256xi1>
    %33 = vector.broadcast %32 : vector<1x256xi1> to vector<4x256xi1>
    %34 = vector.broadcast %cst_10 : f32 to vector<4x256xf32>
    %35 = arith.select %33, %31, %34 : vector<4x256xi1>, vector<4x256xf32>
    %cst_11 = arith.constant 0.000000e+00 : f32
    %36 = vector.broadcast %cst_11 : f32 to vector<4x16xf32>
    %37 = vector.extract_strided_slice %7 {offsets = [0, 0], sizes = [4, 240], strides = [1, 1]} : vector<4x256xf32> to vector<4x240xf32>
    %38 = tpu.concatenate %36, %37 in 1 : vector<4x16xf32>, vector<4x240xf32> -> vector<4x256xf32>
    %cst_12 = arith.constant 0.000000e+00 : f32
    %39 = vector.broadcast %cst_12 : f32 to vector<4x15xf32>
    %40 = vector.extract_strided_slice %7 {offsets = [0, 0], sizes = [4, 241], strides = [1, 1]} : vector<4x256xf32> to vector<4x241xf32>
    %41 = tpu.concatenate %39, %40 in 1 : vector<4x15xf32>, vector<4x241xf32> -> vector<4x256xf32>
    %cst_13 = arith.constant 0.000000e+00 : f32
    %42 = vector.shape_cast %28 : vector<1x256xi1> to vector<1x256xi1>
    %43 = vector.broadcast %42 : vector<1x256xi1> to vector<4x256xi1>
    %44 = vector.broadcast %cst_13 : f32 to vector<4x256xf32>
    %45 = arith.select %43, %41, %44 : vector<4x256xi1>, vector<4x256xf32>
    %cst_14 = arith.constant 0.000000e+00 : f32
    %46 = vector.broadcast %cst_14 : f32 to vector<4x1xf32>
    %47 = vector.extract_strided_slice %7 {offsets = [0, 0], sizes = [4, 255], strides = [1, 1]} : vector<4x256xf32> to vector<4x255xf32>
    %48 = tpu.concatenate %46, %47 in 1 : vector<4x1xf32>, vector<4x255xf32> -> vector<4x256xf32>
    %cst_15 = arith.constant 0.000000e+00 : f32
    %49 = vector.shape_cast %26 : vector<1x256xi1> to vector<1x256xi1>
    %50 = vector.broadcast %49 : vector<1x256xi1> to vector<4x256xi1>
    %51 = vector.broadcast %cst_15 : f32 to vector<4x256xf32>
    %52 = arith.select %50, %48, %51 : vector<4x256xi1>, vector<4x256xf32>
    %53 = vector.extract_strided_slice %7 {offsets = [0, 1], sizes = [4, 255], strides = [1, 1]} : vector<4x256xf32> to vector<4x255xf32>
    %cst_16 = arith.constant 0.000000e+00 : f32
    %54 = vector.broadcast %cst_16 : f32 to vector<4x1xf32>
    %55 = tpu.concatenate %53, %54 in 1 : vector<4x255xf32>, vector<4x1xf32> -> vector<4x256xf32>
    %cst_17 = arith.constant 0.000000e+00 : f32
    %56 = vector.shape_cast %28 : vector<1x256xi1> to vector<1x256xi1>
    %57 = vector.broadcast %56 : vector<1x256xi1> to vector<4x256xi1>
    %58 = vector.broadcast %cst_17 : f32 to vector<4x256xf32>
    %59 = arith.select %57, %55, %58 : vector<4x256xi1>, vector<4x256xf32>
    %60 = vector.extract_strided_slice %7 {offsets = [0, 15], sizes = [4, 241], strides = [1, 1]} : vector<4x256xf32> to vector<4x241xf32>
    %cst_18 = arith.constant 0.000000e+00 : f32
    %61 = vector.broadcast %cst_18 : f32 to vector<4x15xf32>
    %62 = tpu.concatenate %60, %61 in 1 : vector<4x241xf32>, vector<4x15xf32> -> vector<4x256xf32>
    %cst_19 = arith.constant 0.000000e+00 : f32
    %63 = vector.shape_cast %26 : vector<1x256xi1> to vector<1x256xi1>
    %64 = vector.broadcast %63 : vector<1x256xi1> to vector<4x256xi1>
    %65 = vector.broadcast %cst_19 : f32 to vector<4x256xf32>
    %66 = arith.select %64, %62, %65 : vector<4x256xi1>, vector<4x256xf32>
    %67 = vector.extract_strided_slice %7 {offsets = [0, 16], sizes = [4, 240], strides = [1, 1]} : vector<4x256xf32> to vector<4x240xf32>
    %cst_20 = arith.constant 0.000000e+00 : f32
    %68 = vector.broadcast %cst_20 : f32 to vector<4x16xf32>
    %69 = tpu.concatenate %67, %68 in 1 : vector<4x240xf32>, vector<4x16xf32> -> vector<4x256xf32>
    %70 = vector.extract_strided_slice %7 {offsets = [0, 17], sizes = [4, 239], strides = [1, 1]} : vector<4x256xf32> to vector<4x239xf32>
    %cst_21 = arith.constant 0.000000e+00 : f32
    %71 = vector.broadcast %cst_21 : f32 to vector<4x17xf32>
    %72 = tpu.concatenate %70, %71 in 1 : vector<4x239xf32>, vector<4x17xf32> -> vector<4x256xf32>
    %cst_22 = arith.constant 0.000000e+00 : f32
    %73 = vector.shape_cast %28 : vector<1x256xi1> to vector<1x256xi1>
    %74 = vector.broadcast %73 : vector<1x256xi1> to vector<4x256xi1>
    %75 = vector.broadcast %cst_22 : f32 to vector<4x256xf32>
    %76 = arith.select %74, %72, %75 : vector<4x256xi1>, vector<4x256xf32>
    %77 = tpu.concatenate %35, %38, %45, %52, %7, %59, %66, %69, %76 in 0 : vector<4x256xf32>, vector<4x256xf32>, vector<4x256xf32>, vector<4x256xf32>, vector<4x256xf32>, vector<4x256xf32>, vector<4x256xf32>, vector<4x256xf32>, vector<4x256xf32> -> vector<36x256xf32>
    %78 = arith.truncf %77 : vector<36x256xf32> to vector<36x256xbf16>
    %c0_23 = arith.constant 0 : index
    %c0_24 = arith.constant 0 : index
    %79 = vector.load %arg4[%c0_23, %c0_24] : memref<4x36xbf16, #tpu.memory_space<vmem>>, vector<4x36xbf16>
    %cst_25 = arith.constant dense<0.000000e+00> : vector<4x256xf32>
    %80 = tpu.matmul %79, %78, %cst_25 {dimension_numbers = #tpu.dot_dimension_numbers<[1], [0], [0], [1], [0, 0, 1, 1], [], []>} : vector<4x36xbf16>, vector<36x256xbf16>, vector<4x256xf32> -> vector<4x256xf32>
    %81 = arith.truncf %80 : vector<4x256xf32> to vector<4x256xbf16>
    %c0_26 = arith.constant 0 : index
    %c0_27 = arith.constant 0 : index
    %c0_28 = arith.constant 0 : index
    %82 = vector.load %arg5[%c0_26, %c0_27, %c0_28] : memref<1x4x256xbf16, #tpu.memory_space<vmem>>, vector<1x4x256xbf16>
    %83 = vector.shape_cast %82 : vector<1x4x256xbf16> to vector<4x256xbf16>
    %84 = vector.shape_cast %81 : vector<4x256xbf16> to vector<1x4x256xbf16>
    tpu.vector_store %arg5[%c0_26, %c0_27, %c0_28], %84 {strides = array<i32>} : memref<1x4x256xbf16, #tpu.memory_space<vmem>>, vector<1x4x256xbf16>,
    %cst_29 = arith.constant dense<0.000000e+00> : vector<4xf32>
    %85 = vector.multi_reduction <add>, %80, %cst_29 [1] : vector<4x256xf32> to vector<4xf32>
    %86 = vector.shape_cast %85 : vector<4xf32> to vector<4x1xf32>
    %c0_30 = arith.constant 0 : index
    %c0_31 = arith.constant 0 : index
    %c0_32 = arith.constant 0 : index
    %87 = vector.load %arg6[%c0_30, %c0_31, %c0_32] : memref<1x4x1xf32, #tpu.memory_space<vmem>>, vector<1x4x1xf32>
    %88 = vector.shape_cast %87 : vector<1x4x1xf32> to vector<4x1xf32>
    %89 = vector.shape_cast %86 : vector<4x1xf32> to vector<1x4x1xf32>
    tpu.vector_store %arg6[%c0_30, %c0_31, %c0_32], %89 {strides = array<i32>} : memref<1x4x1xf32, #tpu.memory_space<vmem>>, vector<1x4x1xf32>,
    %90 = arith.mulf %80, %80 : vector<4x256xf32>
    %cst_33 = arith.constant dense<0.000000e+00> : vector<4xf32>
    %91 = vector.multi_reduction <add>, %90, %cst_33 [1] : vector<4x256xf32> to vector<4xf32>
    %92 = vector.shape_cast %91 : vector<4xf32> to vector<4x1xf32>
    %c0_34 = arith.constant 0 : index
    %c0_35 = arith.constant 0 : index
    %c0_36 = arith.constant 0 : index
    %93 = vector.load %arg7[%c0_34, %c0_35, %c0_36] : memref<1x4x1xf32, #tpu.memory_space<vmem>>, vector<1x4x1xf32>
    %94 = vector.shape_cast %93 : vector<1x4x1xf32> to vector<4x1xf32>
    %95 = vector.shape_cast %92 : vector<4x1xf32> to vector<1x4x1xf32>
    tpu.vector_store %arg7[%c0_34, %c0_35, %c0_36], %95 {strides = array<i32>} : memref<1x4x1xf32, #tpu.memory_space<vmem>>, vector<1x4x1xf32>,
    return
  }
  func.func @transform_0(%arg0: i32) -> (i32, i32, i32) {
    %c0_i32 = arith.constant 0 : i32
    %c0_i32_0 = arith.constant 0 : i32
    %c0_i32_1 = arith.constant 0 : i32
    return %arg0, %c0_i32, %c0_i32_0 : i32, i32, i32
  }
  func.func @transform_1(%arg0: i32) -> (i32, i32) {
    %c0_i32 = arith.constant 0 : i32
    %c0_i32_0 = arith.constant 0 : i32
    %c0_i32_1 = arith.constant 0 : i32
    return %c0_i32, %c0_i32_0 : i32, i32
  }
  func.func @transform_2(%arg0: i32) -> (i32, i32) {
    %c0_i32 = arith.constant 0 : i32
    %c0_i32_0 = arith.constant 0 : i32
    %c0_i32_1 = arith.constant 0 : i32
    return %c0_i32, %c0_i32_0 : i32, i32
  }
  func.func @transform_3(%arg0: i32) -> (i32, i32) {
    %c0_i32 = arith.constant 0 : i32
    %c0_i32_0 = arith.constant 0 : i32
    %c0_i32_1 = arith.constant 0 : i32
    return %c0_i32, %c0_i32_0 : i32, i32
  }
  func.func @transform_4(%arg0: i32) -> (i32, i32, i32) {
    %c0_i32 = arith.constant 0 : i32
    %c0_i32_0 = arith.constant 0 : i32
    %c0_i32_1 = arith.constant 0 : i32
    return %arg0, %c0_i32, %c0_i32_0 : i32, i32, i32
  }
  func.func @transform_5(%arg0: i32) -> (i32, i32, i32) {
    %c0_i32 = arith.constant 0 : i32
    %c0_i32_0 = arith.constant 0 : i32
    %c0_i32_1 = arith.constant 0 : i32
    return %arg0, %c0_i32, %c0_i32_0 : i32, i32, i32
  }
  func.func @transform_6(%arg0: i32) -> (i32, i32, i32) {
    %c0_i32 = arith.constant 0 : i32
    %c0_i32_0 = arith.constant 0 : i32
    %c0_i32_1 = arith.constant 0 : i32
    return %arg0, %c0_i32, %c0_i32_0 : i32, i32, i32
  }
}

module attributes {stable_mosaic.version = 11 : i64} {
  func.func @_conv_stats_kernel(%arg0: i32, %arg1: memref<1x4x256xbf16, #tpu.memory_space<vmem>>, %arg2: memref<4x1xf32, #tpu.memory_space<vmem>>, %arg3: memref<4x1xf32, #tpu.memory_space<vmem>>, %arg4: memref<4x36xbf16, #tpu.memory_space<vmem>>, %arg5: memref<1x4x256xbf16, #tpu.memory_space<vmem>>, %arg6: memref<1x4x1xf32, #tpu.memory_space<vmem>>, %arg7: memref<1x4x1xf32, #tpu.memory_space<vmem>>) attributes {dimension_semantics = [#tpu.dimension_semantics<parallel>], iteration_bounds = array<i64: 2>, scalar_prefetch = 0 : i64, scratch_operands = 0 : i64, tpu.core_type = #tpu.core_type<tc>, window_params = [{transform_indices = @transform_0, window_bounds = array<i64: 1, 4, 256>}, {pipeline_mode = #tpu.pipeline_mode<synchronous>, transform_indices = @transform_1, window_bounds = array<i64: 4, 1>}, {pipeline_mode = #tpu.pipeline_mode<synchronous>, transform_indices = @transform_2, window_bounds = array<i64: 4, 1>}, {pipeline_mode = #tpu.pipeline_mode<synchronous>, transform_indices = @transform_3, window_bounds = array<i64: 4, 36>}, {transform_indices = @transform_4, window_bounds = array<i64: 1, 4, 256>}, {transform_indices = @transform_5, window_bounds = array<i64: 1, 4, 1>}, {transform_indices = @transform_6, window_bounds = array<i64: 1, 4, 1>}]} {
    %c0 = arith.constant 0 : index
    %c0_0 = arith.constant 0 : index
    %c0_1 = arith.constant 0 : index
    %0 = vector.load %arg1[%c0, %c0_0, %c0_1] : memref<1x4x256xbf16, #tpu.memory_space<vmem>>, vector<1x4x256xbf16>
    %1 = vector.shape_cast %0 : vector<1x4x256xbf16> to vector<4x256xbf16>
    %2 = arith.extf %1 : vector<4x256xbf16> to vector<4x256xf32>
    %c0_2 = arith.constant 0 : index
    %c0_3 = arith.constant 0 : index
    %3 = vector.load %arg2[%c0_2, %c0_3] : memref<4x1xf32, #tpu.memory_space<vmem>>, vector<4x1xf32>
    %4 = vector.broadcast %3 : vector<4x1xf32> to vector<4x256xf32>
    %5 = arith.mulf %2, %4 : vector<4x256xf32>
    %c0_4 = arith.constant 0 : index
    %c0_5 = arith.constant 0 : index
    %6 = vector.load %arg3[%c0_4, %c0_5] : memref<4x1xf32, #tpu.memory_space<vmem>>, vector<4x1xf32>
    %7 = vector.broadcast %6 : vector<4x1xf32> to vector<4x256xf32>
    %8 = arith.addf %5, %7 : vector<4x256xf32>
    %cst = arith.constant 0.000000e+00 : f32
    %9 = vector.broadcast %cst : f32 to vector<4x256xf32>
    %10 = arith.maximumf %8, %9 : vector<4x256xf32>
    %11 = tpu.iota {dimensions = array<i32: 1>} : vector<1x256xi32>
    %c16_i32 = arith.constant 16 : i32
    %c0_i32 = arith.constant 0 : i32
    %12 = arith.cmpi eq, %c16_i32, %c0_i32 : i32
    %c1_i32 = arith.constant 1 : i32
    %13 = arith.select %12, %c1_i32, %c16_i32 : i32
    %14 = vector.broadcast %13 : i32 to vector<1x256xi32>
    %15 = arith.remsi %11, %14 : vector<1x256xi32>
    %c0_i32_6 = arith.constant 0 : i32
    %16 = vector.broadcast %c0_i32_6 : i32 to vector<1x256xi32>
    %17 = arith.cmpi ne, %15, %16 : vector<1x256xi32>
    %c0_i32_7 = arith.constant 0 : i32
    %18 = vector.broadcast %c0_i32_7 : i32 to vector<1x256xi32>
    %19 = arith.cmpi slt, %15, %18 : vector<1x256xi32>
    %c0_i32_8 = arith.constant 0 : i32
    %20 = arith.cmpi slt, %13, %c0_i32_8 : i32
    %21 = vector.broadcast %20 : i1 to vector<1x256xi1>
    %22 = vector.broadcast %21 : vector<1x256xi1> to vector<1x256xi1>
    %23 = arith.xori %19, %22 : vector<1x256xi1>
    %24 = arith.andi %23, %17 : vector<1x256xi1>
    %25 = vector.broadcast %13 : i32 to vector<1x256xi32>
    %26 = arith.addi %15, %25 : vector<1x256xi32>
    %27 = arith.select %24, %26, %15 : vector<1x256xi1>, vector<1x256xi32>
    %c1_i32_9 = arith.constant 1 : i32
    %28 = vector.broadcast %c1_i32_9 : i32 to vector<1x256xi32>
    %29 = arith.cmpi sge, %27, %28 : vector<1x256xi32>
    %c14_i32 = arith.constant 14 : i32
    %30 = vector.broadcast %c14_i32 : i32 to vector<1x256xi32>
    %31 = arith.cmpi sle, %27, %30 : vector<1x256xi32>
    %cst_10 = arith.constant 0.000000e+00 : f32
    %32 = vector.broadcast %cst_10 : f32 to vector<4x17xf32>
    %33 = vector.extract_strided_slice %10 {offsets = [0, 0], sizes = [4, 239], strides = [1, 1]} : vector<4x256xf32> to vector<4x239xf32>
    %34 = tpu.concatenate %32, %33 in 1 : vector<4x17xf32>, vector<4x239xf32> -> vector<4x256xf32>
    %cst_11 = arith.constant 0.000000e+00 : f32
    %35 = vector.shape_cast %29 : vector<1x256xi1> to vector<1x256xi1>
    %36 = vector.broadcast %35 : vector<1x256xi1> to vector<4x256xi1>
    %37 = vector.broadcast %cst_11 : f32 to vector<4x256xf32>
    %38 = arith.select %36, %34, %37 : vector<4x256xi1>, vector<4x256xf32>
    %cst_12 = arith.constant 0.000000e+00 : f32
    %39 = vector.broadcast %cst_12 : f32 to vector<4x16xf32>
    %40 = vector.extract_strided_slice %10 {offsets = [0, 0], sizes = [4, 240], strides = [1, 1]} : vector<4x256xf32> to vector<4x240xf32>
    %41 = tpu.concatenate %39, %40 in 1 : vector<4x16xf32>, vector<4x240xf32> -> vector<4x256xf32>
    %cst_13 = arith.constant 0.000000e+00 : f32
    %42 = vector.broadcast %cst_13 : f32 to vector<4x15xf32>
    %43 = vector.extract_strided_slice %10 {offsets = [0, 0], sizes = [4, 241], strides = [1, 1]} : vector<4x256xf32> to vector<4x241xf32>
    %44 = tpu.concatenate %42, %43 in 1 : vector<4x15xf32>, vector<4x241xf32> -> vector<4x256xf32>
    %cst_14 = arith.constant 0.000000e+00 : f32
    %45 = vector.shape_cast %31 : vector<1x256xi1> to vector<1x256xi1>
    %46 = vector.broadcast %45 : vector<1x256xi1> to vector<4x256xi1>
    %47 = vector.broadcast %cst_14 : f32 to vector<4x256xf32>
    %48 = arith.select %46, %44, %47 : vector<4x256xi1>, vector<4x256xf32>
    %cst_15 = arith.constant 0.000000e+00 : f32
    %49 = vector.broadcast %cst_15 : f32 to vector<4x1xf32>
    %50 = vector.extract_strided_slice %10 {offsets = [0, 0], sizes = [4, 255], strides = [1, 1]} : vector<4x256xf32> to vector<4x255xf32>
    %51 = tpu.concatenate %49, %50 in 1 : vector<4x1xf32>, vector<4x255xf32> -> vector<4x256xf32>
    %cst_16 = arith.constant 0.000000e+00 : f32
    %52 = vector.shape_cast %29 : vector<1x256xi1> to vector<1x256xi1>
    %53 = vector.broadcast %52 : vector<1x256xi1> to vector<4x256xi1>
    %54 = vector.broadcast %cst_16 : f32 to vector<4x256xf32>
    %55 = arith.select %53, %51, %54 : vector<4x256xi1>, vector<4x256xf32>
    %56 = vector.extract_strided_slice %10 {offsets = [0, 1], sizes = [4, 255], strides = [1, 1]} : vector<4x256xf32> to vector<4x255xf32>
    %cst_17 = arith.constant 0.000000e+00 : f32
    %57 = vector.broadcast %cst_17 : f32 to vector<4x1xf32>
    %58 = tpu.concatenate %56, %57 in 1 : vector<4x255xf32>, vector<4x1xf32> -> vector<4x256xf32>
    %cst_18 = arith.constant 0.000000e+00 : f32
    %59 = vector.shape_cast %31 : vector<1x256xi1> to vector<1x256xi1>
    %60 = vector.broadcast %59 : vector<1x256xi1> to vector<4x256xi1>
    %61 = vector.broadcast %cst_18 : f32 to vector<4x256xf32>
    %62 = arith.select %60, %58, %61 : vector<4x256xi1>, vector<4x256xf32>
    %63 = vector.extract_strided_slice %10 {offsets = [0, 15], sizes = [4, 241], strides = [1, 1]} : vector<4x256xf32> to vector<4x241xf32>
    %cst_19 = arith.constant 0.000000e+00 : f32
    %64 = vector.broadcast %cst_19 : f32 to vector<4x15xf32>
    %65 = tpu.concatenate %63, %64 in 1 : vector<4x241xf32>, vector<4x15xf32> -> vector<4x256xf32>
    %cst_20 = arith.constant 0.000000e+00 : f32
    %66 = vector.shape_cast %29 : vector<1x256xi1> to vector<1x256xi1>
    %67 = vector.broadcast %66 : vector<1x256xi1> to vector<4x256xi1>
    %68 = vector.broadcast %cst_20 : f32 to vector<4x256xf32>
    %69 = arith.select %67, %65, %68 : vector<4x256xi1>, vector<4x256xf32>
    %70 = vector.extract_strided_slice %10 {offsets = [0, 16], sizes = [4, 240], strides = [1, 1]} : vector<4x256xf32> to vector<4x240xf32>
    %cst_21 = arith.constant 0.000000e+00 : f32
    %71 = vector.broadcast %cst_21 : f32 to vector<4x16xf32>
    %72 = tpu.concatenate %70, %71 in 1 : vector<4x240xf32>, vector<4x16xf32> -> vector<4x256xf32>
    %73 = vector.extract_strided_slice %10 {offsets = [0, 17], sizes = [4, 239], strides = [1, 1]} : vector<4x256xf32> to vector<4x239xf32>
    %cst_22 = arith.constant 0.000000e+00 : f32
    %74 = vector.broadcast %cst_22 : f32 to vector<4x17xf32>
    %75 = tpu.concatenate %73, %74 in 1 : vector<4x239xf32>, vector<4x17xf32> -> vector<4x256xf32>
    %cst_23 = arith.constant 0.000000e+00 : f32
    %76 = vector.shape_cast %31 : vector<1x256xi1> to vector<1x256xi1>
    %77 = vector.broadcast %76 : vector<1x256xi1> to vector<4x256xi1>
    %78 = vector.broadcast %cst_23 : f32 to vector<4x256xf32>
    %79 = arith.select %77, %75, %78 : vector<4x256xi1>, vector<4x256xf32>
    %80 = tpu.concatenate %38, %41, %48, %55, %10, %62, %69, %72, %79 in 0 : vector<4x256xf32>, vector<4x256xf32>, vector<4x256xf32>, vector<4x256xf32>, vector<4x256xf32>, vector<4x256xf32>, vector<4x256xf32>, vector<4x256xf32>, vector<4x256xf32> -> vector<36x256xf32>
    %81 = arith.truncf %80 : vector<36x256xf32> to vector<36x256xbf16>
    %c0_24 = arith.constant 0 : index
    %c0_25 = arith.constant 0 : index
    %82 = vector.load %arg4[%c0_24, %c0_25] : memref<4x36xbf16, #tpu.memory_space<vmem>>, vector<4x36xbf16>
    %cst_26 = arith.constant dense<0.000000e+00> : vector<4x256xf32>
    %83 = tpu.matmul %82, %81, %cst_26 {dimension_numbers = #tpu.dot_dimension_numbers<[1], [0], [0], [1], [0, 0, 1, 1], [], []>} : vector<4x36xbf16>, vector<36x256xbf16>, vector<4x256xf32> -> vector<4x256xf32>
    %84 = arith.truncf %83 : vector<4x256xf32> to vector<4x256xbf16>
    %c0_27 = arith.constant 0 : index
    %c0_28 = arith.constant 0 : index
    %c0_29 = arith.constant 0 : index
    %85 = vector.load %arg5[%c0_27, %c0_28, %c0_29] : memref<1x4x256xbf16, #tpu.memory_space<vmem>>, vector<1x4x256xbf16>
    %86 = vector.shape_cast %85 : vector<1x4x256xbf16> to vector<4x256xbf16>
    %87 = vector.shape_cast %84 : vector<4x256xbf16> to vector<1x4x256xbf16>
    tpu.vector_store %arg5[%c0_27, %c0_28, %c0_29], %87 {strides = array<i32>} : memref<1x4x256xbf16, #tpu.memory_space<vmem>>, vector<1x4x256xbf16>,
    %cst_30 = arith.constant dense<0.000000e+00> : vector<4xf32>
    %88 = vector.multi_reduction <add>, %83, %cst_30 [1] : vector<4x256xf32> to vector<4xf32>
    %89 = vector.shape_cast %88 : vector<4xf32> to vector<4x1xf32>
    %c0_31 = arith.constant 0 : index
    %c0_32 = arith.constant 0 : index
    %c0_33 = arith.constant 0 : index
    %90 = vector.load %arg6[%c0_31, %c0_32, %c0_33] : memref<1x4x1xf32, #tpu.memory_space<vmem>>, vector<1x4x1xf32>
    %91 = vector.shape_cast %90 : vector<1x4x1xf32> to vector<4x1xf32>
    %92 = vector.shape_cast %89 : vector<4x1xf32> to vector<1x4x1xf32>
    tpu.vector_store %arg6[%c0_31, %c0_32, %c0_33], %92 {strides = array<i32>} : memref<1x4x1xf32, #tpu.memory_space<vmem>>, vector<1x4x1xf32>,
    %93 = arith.mulf %83, %83 : vector<4x256xf32>
    %cst_34 = arith.constant dense<0.000000e+00> : vector<4xf32>
    %94 = vector.multi_reduction <add>, %93, %cst_34 [1] : vector<4x256xf32> to vector<4xf32>
    %95 = vector.shape_cast %94 : vector<4xf32> to vector<4x1xf32>
    %c0_35 = arith.constant 0 : index
    %c0_36 = arith.constant 0 : index
    %c0_37 = arith.constant 0 : index
    %96 = vector.load %arg7[%c0_35, %c0_36, %c0_37] : memref<1x4x1xf32, #tpu.memory_space<vmem>>, vector<1x4x1xf32>
    %97 = vector.shape_cast %96 : vector<1x4x1xf32> to vector<4x1xf32>
    %98 = vector.shape_cast %95 : vector<4x1xf32> to vector<1x4x1xf32>
    tpu.vector_store %arg7[%c0_35, %c0_36, %c0_37], %98 {strides = array<i32>} : memref<1x4x1xf32, #tpu.memory_space<vmem>>, vector<1x4x1xf32>,
    return
  }
  func.func @transform_0(%arg0: i32) -> (i32, i32, i32) {
    %c0_i32 = arith.constant 0 : i32
    %c0_i32_0 = arith.constant 0 : i32
    %c0_i32_1 = arith.constant 0 : i32
    return %arg0, %c0_i32, %c0_i32_0 : i32, i32, i32
  }
  func.func @transform_1(%arg0: i32) -> (i32, i32) {
    %c0_i32 = arith.constant 0 : i32
    %c0_i32_0 = arith.constant 0 : i32
    %c0_i32_1 = arith.constant 0 : i32
    return %c0_i32, %c0_i32_0 : i32, i32
  }
  func.func @transform_2(%arg0: i32) -> (i32, i32) {
    %c0_i32 = arith.constant 0 : i32
    %c0_i32_0 = arith.constant 0 : i32
    %c0_i32_1 = arith.constant 0 : i32
    return %c0_i32, %c0_i32_0 : i32, i32
  }
  func.func @transform_3(%arg0: i32) -> (i32, i32) {
    %c0_i32 = arith.constant 0 : i32
    %c0_i32_0 = arith.constant 0 : i32
    %c0_i32_1 = arith.constant 0 : i32
    return %c0_i32, %c0_i32_0 : i32, i32
  }
  func.func @transform_4(%arg0: i32) -> (i32, i32, i32) {
    %c0_i32 = arith.constant 0 : i32
    %c0_i32_0 = arith.constant 0 : i32
    %c0_i32_1 = arith.constant 0 : i32
    return %arg0, %c0_i32, %c0_i32_0 : i32, i32, i32
  }
  func.func @transform_5(%arg0: i32) -> (i32, i32, i32) {
    %c0_i32 = arith.constant 0 : i32
    %c0_i32_0 = arith.constant 0 : i32
    %c0_i32_1 = arith.constant 0 : i32
    return %arg0, %c0_i32, %c0_i32_0 : i32, i32, i32
  }
  func.func @transform_6(%arg0: i32) -> (i32, i32, i32) {
    %c0_i32 = arith.constant 0 : i32
    %c0_i32_0 = arith.constant 0 : i32
    %c0_i32_1 = arith.constant 0 : i32
    return %arg0, %c0_i32, %c0_i32_0 : i32, i32, i32
  }
}

</mosaic_0001>

<llo_original>
// kernel: residual_block_nchw.3
$region0: #{residual_block_nchw.3}
  #allocation0 [shape = 'u32[]', space=smem, size = 0x4, offset = 0x4, fixed_abs, tag = 'smem constant byte address 0x4 - core index']
  #allocation1 [shape = 'u32[144,128]{1,0:T(1,128)}', space=vmem, size = 0x12000, scoped, tag = 'internal scratch']
  %s0 = inlined_call_operand.vmem [shape: bf16[2,4,256], index: 0, kind: input, shape index: {}]
  %s1 = inlined_call_operand.vmem [shape: f32[4,1], index: 1, kind: input, shape index: {}]
  %s2 = inlined_call_operand.vmem [shape: f32[4,1], index: 2, kind: input, shape index: {}]
  %s3 = inlined_call_operand.vmem [shape: bf16[4,36], index: 3, kind: input, shape index: {}]
  %s4 = inlined_call_operand.vmem [shape: bf16[2,4,256], index: 4, kind: output, shape index: {0}]
  %s5 = inlined_call_operand.vmem [shape: f32[2,4,1], index: 5, kind: output, shape index: {1}]
  %s6 = inlined_call_operand.vmem [shape: f32[2,4,1], index: 6, kind: output, shape index: {2}]
  %7 = xla_tuple %s4, %s5, %s6
  %s8 = sld [smem:[#allocation0]]
  $region65: #{residual_block_nchw.3} parent=0
    _
  %s10 = ssub.s32 1, %s8
  %s11 = scalar_select 0, %s10, %s8
  loop: start=0, step=1, limit=4
  $region2: #{residual_block_nchw.3} parent=0 // loop_pre_header
    _
  $region3: #{residual_block_nchw.3} parent=0 // loop_header
    %s13 = sphi 0, %s17
    %p14 = scmp.ge.s32.totalorder %s13, 4
    %s23 = sphi 0, %s25
    %s26 = sphi 0, %s23
    %s27 = sphi 0, %s26
    %s43 = sphi 0, %s27
    %s47 = sphi 0, %s47
    %s49 = sphi 0, %s47
    %s50 = sphi 0, %s49
    %s64 = sphi 0, %s50
    %s68 = sphi 0, %s68
    %s70 = sphi 0, %s68
    %s71 = sphi 0, %s70
    %s85 = sphi 0, %s71
    %s89 = sphi 0, %s89
    %s91 = sphi 0, %s89
    %s92 = sphi 0, %s91
    %s106 = sphi 0, %s92
    %s112 = sphi 0, %s114
    %s115 = sphi 0, %s112
    %s116 = sphi 0, %s115
    %s132 = sphi 0, %s116
    %s138 = sphi 0, %s140
    %s141 = sphi 0, %s138
    %s142 = sphi 0, %s141
    %s158 = sphi 0, %s142
    %s164 = sphi 0, %s166
    %s167 = sphi 0, %s164
    %s168 = sphi 0, %s167
    %s184 = sphi 0, %s168
  $region4: #{residual_block_nchw.3} parent=0 // loop_header_branch
    %16 = sbr.rel (%p14) target = $region8
  $region5: #{residual_block_nchw.3} parent=0 // loop_body
    %s18 = ssub.s32 %s13, 1
    %s19 = ssub.s32 %s13, 2
    %s20 = sadd.s32 %s13, 1
    %s21 = ssub.s32 %s13, %s20
    %p22 = scmp.eq.s32.totalorder %s21, 0
    %s24 = sadd.s32 %s23, 1
    %s25 = scalar_select %p22, %s23, %s24
    %p28 = pneg %p22
    %p29 = scmp.eq.s32.totalorder %s13, 1
    %p30 = por %p28, %p29
    %p31 = scmp.ne.s32.totalorder %s23, %s26
    %p32 = scmp.eq.s32.totalorder %s13, 0
    %p33 = por %p31, %p32
    %p34 = scmp.ne.s32.totalorder %s23, %s26
    %p35 = scmp.eq.s32.totalorder %s18, 1
    %p36 = por %p34, %p35
    %p37 = scmp.ne.s32.totalorder %s26, %s27
    %p38 = scmp.eq.s32.totalorder %s18, 0
    %p39 = por %p37, %p38
    %p40 = scmp.ne.s32.totalorder %s26, %s27
    %p41 = scmp.eq.s32.totalorder %s19, 1
    %p42 = por %p40, %p41
    %p44 = scmp.ne.s32.totalorder %s27, %s43
    %p45 = scmp.eq.s32.totalorder %s19, 0
    %p46 = por %p44, %p45
    %s48 = sadd.s32 %s47, 1
    %p51 = scmp.eq.s32.totalorder %s13, 1
    %p52 = scmp.ne.s32.totalorder %s47, %s49
    %p53 = scmp.eq.s32.totalorder %s13, 0
    %p54 = por %p52, %p53
    %p55 = scmp.ne.s32.totalorder %s47, %s49
    %p56 = scmp.eq.s32.totalorder %s18, 1
    %p57 = por %p55, %p56
    %p58 = scmp.ne.s32.totalorder %s49, %s50
    %p59 = scmp.eq.s32.totalorder %s18, 0
    %p60 = por %p58, %p59
    %p61 = scmp.ne.s32.totalorder %s49, %s50
    %p62 = scmp.eq.s32.totalorder %s19, 1
    %p63 = por %p61, %p62
    %p65 = scmp.ne.s32.totalorder %s50, %s64
    %p66 = scmp.eq.s32.totalorder %s19, 0
    %p67 = por %p65, %p66
    %s69 = sadd.s32 %s68, 1
    %p72 = scmp.eq.s32.totalorder %s13, 1
    %p73 = scmp.ne.s32.totalorder %s68, %s70
    %p74 = scmp.eq.s32.totalorder %s13, 0
    %p75 = por %p73, %p74
    %p76 = scmp.ne.s32.totalorder %s68, %s70
    %p77 = scmp.eq.s32.totalorder %s18, 1
    %p78 = por %p76, %p77
    %p79 = scmp.ne.s32.totalorder %s70, %s71
    %p80 = scmp.eq.s32.totalorder %s18, 0
    %p81 = por %p79, %p80
    %p82 = scmp.ne.s32.totalorder %s70, %s71
    %p83 = scmp.eq.s32.totalorder %s19, 1
    %p84 = por %p82, %p83
    %p86 = scmp.ne.s32.totalorder %s71, %s85
    %p87 = scmp.eq.s32.totalorder %s19, 0
    %p88 = por %p86, %p87
    %s90 = sadd.s32 %s89, 1
    %p93 = scmp.eq.s32.totalorder %s13, 1
    %p94 = scmp.ne.s32.totalorder %s89, %s91
    %p95 = scmp.eq.s32.totalorder %s13, 0
    %p96 = por %p94, %p95
    %p97 = scmp.ne.s32.totalorder %s89, %s91
    %p98 = scmp.eq.s32.totalorder %s18, 1
    %p99 = por %p97, %p98
    %p100 = scmp.ne.s32.totalorder %s91, %s92
    %p101 = scmp.eq.s32.totalorder %s18, 0
    %p102 = por %p100, %p101
    %p103 = scmp.ne.s32.totalorder %s91, %s92
    %p104 = scmp.eq.s32.totalorder %s19, 1
    %p105 = por %p103, %p104
    %p107 = scmp.ne.s32.totalorder %s92, %s106
    %p108 = scmp.eq.s32.totalorder %s19, 0
    %p109 = por %p107, %p108
    %s110 = ssub.s32 %s13, %s20
    %p111 = scmp.eq.s32.totalorder %s110, 0
    %s113 = sadd.s32 %s112, 1
    %s114 = scalar_select %p111, %s112, %s113
    %p117 = pneg %p111
    %p118 = scmp.eq.s32.totalorder %s13, 1
    %p119 = por %p117, %p118
    %p120 = scmp.ne.s32.totalorder %s112, %s115
    %p121 = scmp.eq.s32.totalorder %s13, 0
    %p122 = por %p120, %p121
    %p123 = scmp.ne.s32.totalorder %s112, %s115
    %p124 = scmp.eq.s32.totalorder %s18, 1
    %p125 = por %p123, %p124
    %p126 = scmp.ne.s32.totalorder %s115, %s116
    %p127 = scmp.eq.s32.totalorder %s18, 0
    %p128 = por %p126, %p127
    %p129 = scmp.ne.s32.totalorder %s115, %s116
    %p130 = scmp.eq.s32.totalorder %s19, 1
    %p131 = por %p129, %p130
    %p133 = scmp.ne.s32.totalorder %s116, %s132
    %p134 = scmp.eq.s32.totalorder %s19, 0
    %p135 = por %p133, %p134
    %s136 = ssub.s32 %s13, %s20
    %p137 = scmp.eq.s32.totalorder %s136, 0
    %s139 = sadd.s32 %s138, 1
    %s140 = scalar_select %p137, %s138, %s139
    %p143 = pneg %p137
    %p144 = scmp.eq.s32.totalorder %s13, 1
    %p145 = por %p143, %p144
    %p146 = scmp.ne.s32.totalorder %s138, %s141
    %p147 = scmp.eq.s32.totalorder %s13, 0
    %p148 = por %p146, %p147
    %p149 = scmp.ne.s32.totalorder %s138, %s141
    %p150 = scmp.eq.s32.totalorder %s18, 1
    %p151 = por %p149, %p150
    %p152 = scmp.ne.s32.totalorder %s141, %s142
    %p153 = scmp.eq.s32.totalorder %s18, 0
    %p154 = por %p152, %p153
    %p155 = scmp.ne.s32.totalorder %s141, %s142
    %p156 = scmp.eq.s32.totalorder %s19, 1
    %p157 = por %p155, %p156
    %p159 = scmp.ne.s32.totalorder %s142, %s158
    %p160 = scmp.eq.s32.totalorder %s19, 0
    %p161 = por %p159, %p160
    %s162 = ssub.s32 %s13, %s20
    %p163 = scmp.eq.s32.totalorder %s162, 0
    %s165 = sadd.s32 %s164, 1
    %s166 = scalar_select %p163, %s164, %s165
    %p169 = pneg %p163
    %p170 = scmp.eq.s32.totalorder %s13, 1
    %p171 = por %p169, %p170
    %p172 = scmp.ne.s32.totalorder %s164, %s167
    %p173 = scmp.eq.s32.totalorder %s13, 0
    %p174 = por %p172, %p173
    %p175 = scmp.ne.s32.totalorder %s164, %s167
    %p176 = scmp.eq.s32.totalorder %s18, 1
    %p177 = por %p175, %p176
    %p178 = scmp.ne.s32.totalorder %s167, %s168
    %p179 = scmp.eq.s32.totalorder %s18, 0
    %p180 = por %p178, %p179
    %p181 = scmp.ne.s32.totalorder %s167, %s168
    %p182 = scmp.eq.s32.totalorder %s19, 1
    %p183 = por %p181, %p182
    %p185 = scmp.ne.s32.totalorder %s168, %s184
    %p186 = scmp.eq.s32.totalorder %s19, 0
    %p187 = por %p185, %p186
    %p188 = scmp.le.s32.totalorder 1, %s13
    %p189 = scmp.lt.s32.totalorder %s13, 3
    %p190 = pnand %p188, %p189
    %p191 = pneg %p190
    // Predicated region
    $region9: #{residual_block_nchw.3} parent=5 // pred_check
      _
    $region10: #{residual_block_nchw.3} parent=5 // pred_check_branch
      %193 = sbr.rel (%p190) target = $region12
    $region11: #{residual_block_nchw.3} parent=5 // pred_region
      %s194 = ssub.s32 %s13, 1
      // Predicated region
      $region13: #{residual_block_nchw.3} parent=11 // pred_check
        %p195 = pneg %p60
      $region14: #{residual_block_nchw.3} parent=11 // pred_check_branch
        %197 = sbr.rel (%p195) target = $region16
      $region15: #{residual_block_nchw.3} parent=11 // pred_region
        _
      $region16: #{residual_block_nchw.3} parent=11 // pred_fallthru
        _
      // Predicated region
      $region17: #{residual_block_nchw.3} parent=11 // pred_check
        %p198 = pneg %p81
      $region18: #{residual_block_nchw.3} parent=11 // pred_check_branch
        %200 = sbr.rel (%p198) target = $region20
      $region19: #{residual_block_nchw.3} parent=11 // pred_region
        _
      $region20: #{residual_block_nchw.3} parent=11 // pred_fallthru
        _
      // Predicated region
      $region21: #{residual_block_nchw.3} parent=11 // pred_check
        %p201 = pneg %p102
      $region22: #{residual_block_nchw.3} parent=11 // pred_check_branch
        %203 = sbr.rel (%p201) target = $region24
      $region23: #{residual_block_nchw.3} parent=11 // pred_region
        _
      $region24: #{residual_block_nchw.3} parent=11 // pred_fallthru
        _
    $region12: #{residual_block_nchw.3} parent=5 // pred_fallthru
      _
    %p204 = scmp.lt.s32.totalorder %s13, 2
    // Predicated region
    $region25: #{residual_block_nchw.3} parent=5 // pred_check
      %p205 = pneg %p204
    $region26: #{residual_block_nchw.3} parent=5 // pred_check_branch
      %207 = sbr.rel (%p205) target = $region28
    $region27: #{residual_block_nchw.3} parent=5 // pred_region
      // Predicated region
      $region29: #{residual_block_nchw.3} parent=27 // pred_check
        %p208 = pneg %p33
      $region30: #{residual_block_nchw.3} parent=27 // pred_check_branch
        %210 = sbr.rel (%p208) target = $region32
      $region31: #{residual_block_nchw.3} parent=27 // pred_region
        %p211 = scmp.lt.s32.totalorder %s13, 1
        %s212 = scalar_select %p211, %s13, 1
        %s213 = smul.addr %s212, 2
        %s214 = smul.addr %s213, 2
        %s215 = scalar_lea.vmem %s0, %s214
      $region32: #{residual_block_nchw.3} parent=27 // pred_fallthru
        _
    $region28: #{residual_block_nchw.3} parent=5 // pred_fallthru
      _
    %p216 = scmp.le.s32.totalorder 1, %s13
    %p217 = scmp.lt.s32.totalorder %s13, 3
    %p218 = pnand %p216, %p217
    %p219 = pneg %p218
    // Predicated region
    $region33: #{residual_block_nchw.3} parent=5 // pred_check
      _
    $region34: #{residual_block_nchw.3} parent=5 // pred_check_branch
      %221 = sbr.rel (%p218) target = $region36
    $region35: #{residual_block_nchw.3} parent=5 // pred_region
      %s222 = ssub.s32 %s13, 1
      %p223 = scmp.lt.s32.totalorder %s18, 1
      %s224 = scalar_select %p223, %s18, 1
      %s225 = smul.addr %s224, 2
      %s226 = smul.addr %s225, 2
      %s227 = scalar_lea.vmem %s0, %s226
      %p228 = pneg %p39
      %p229 = pneg %p36
      %p230 = pneg %p60
      %p231 = pneg %p57
      %p232 = pneg %p81
      %p233 = pneg %p78
      %p234 = pneg %p102
      %p235 = pneg %p99
      %p236 = pneg %p128
      %p237 = pneg %p125
      %p238 = scmp.lt.s32.totalorder %s18, 1
      %s239 = scalar_select %p238, %s18, 1
      %s240 = smul.addr %s239, 2
      %s241 = smul.addr %s240, 2
      %s242 = scalar_lea.vmem %s4, %s241
      %p243 = pneg %p154
      %p244 = pneg %p151
      %p245 = scmp.lt.s32.totalorder %s18, 1
      %s246 = scalar_select %p245, %s18, 1
      %s247 = smul.addr %s246, 4
      %s248 = scalar_lea.vmem %s5, %s247
      %p249 = pneg %p180
      %p250 = pneg %p177
      %p251 = scmp.lt.s32.totalorder %s18, 1
      %s252 = scalar_select %p251, %s18, 1
      %s253 = smul.addr %s252, 4
      %s254 = scalar_lea.vmem %s6, %s253
      %p255 = scmp.lt.s32.totalorder %s18, 1
      %s256 = scalar_select %p255, %s18, 1
      %s257 = smul.addr %s256, 2
      %s258 = smul.addr %s257, 2
      %s259 = scalar_lea.vmem %s0, %s258
      %p260 = scmp.lt.s32.totalorder %s18, 1
      %s261 = scalar_select %p260, %s18, 1
      %s262 = smul.addr %s261, 2
      %s263 = smul.addr %s262, 2
      %s264 = scalar_lea.vmem %s4, %s263
      %p265 = scmp.lt.s32.totalorder %s18, 1
      %s266 = scalar_select %p265, %s18, 1
      %s267 = smul.addr %s266, 4
      %s268 = scalar_lea.vmem %s5, %s267
      %p269 = scmp.lt.s32.totalorder %s18, 1
      %s270 = scalar_select %p269, %s18, 1
      %s271 = smul.addr %s270, 4
      %s272 = scalar_lea.vmem %s6, %s271
      %v274 = vld [vmem:[%s259] sm:$0xf]
      %v275 = vunpack.c.l.bf16 %v274
      %v276 = vld [vmem:[%s1] sm:$0xf]
      %278 = vset.pattern.permute.xlu0 0
      %279 = vperm.xlu0 %278, %v276
      %v280 = vpop.permute.xlu0 %279
      %v282 = vunpack.c.l.s4 839922192
      %v283 = vunpack.c.0.s8 %v282
      %v284 = vlaneseq
      %v285 = vshrl.u32 %v284, 7
      %v286 = vsub.s32 %v283, %v285
      %v287 = vrot.slane %v280, %v286
      %v289 = vmul.f32 %v275, %v287
      %v290 = vld [vmem:[%s2] sm:$0xf]
      %292 = vset.pattern.permute.xlu0 0
      %293 = vperm.xlu0 %292, %v290
      %v294 = vpop.permute.xlu0 %293
      %v296 = vunpack.c.l.s4 839922192
      %v297 = vunpack.c.0.s8 %v296
      %v298 = vlaneseq
      %v299 = vshrl.u32 %v298, 7
      %v300 = vsub.s32 %v297, %v299
      %v301 = vrot.slane %v294, %v300
      %v303 = vadd.f32 %v289, %v301
      %v304 = vmax.f32 %v303, 0.0
      %v305 = vlaneseq
      %v306 = vand.u32 %v305, 127
      %v307 = vadd.s32 %v306, 128
      %vm308 = vcmp.lt.s32.totalorder %v306, 0
      %v309 = vsub.s32 0, %v306
      %v310 = vsel %vm308, %v309, %v306
      %v311 = vshrl.u32 %v310, 4
      %v312 = vand.u32 %v310, 15
      %v313 = vsub.s32 0, %v312
      %v314 = vsel %vm308, %v313, %v312
      %vm315 = vcmp.lt.s32.totalorder %v307, 0
      %v316 = vsub.s32 0, %v307
      %v317 = vsel %vm315, %v316, %v307
      %v318 = vshrl.u32 %v317, 4
      %v319 = vand.u32 %v317, 15
      %v320 = vsub.s32 0, %v319
      %v321 = vsel %vm315, %v320, %v319
      %vm322 = vcmp.ne.s32.totalorder %v314, 0
      %vm323 = vcmp.ne.s32.totalorder %v321, 0
      %vm324 = vcmp.lt.s32.totalorder %v314, 0
      %vm325 = vcmp.lt.s32.totalorder %v321, 0
      %vm326 = vmand %vm324, %vm322
      %vm327 = vmand %vm325, %vm323
      %v328 = vadd.s32 %v314, 16
      %v329 = vadd.s32 %v321, 16
      %v330 = vsel %vm326, %v328, %v314
      %v331 = vsel %vm327, %v329, %v321
      %vm332 = vcmp.ge.s32.totalorder %v330, 1
      %vm333 = vcmp.ge.s32.totalorder %v331, 1
      %vm334 = vcmp.le.s32.totalorder %v330, 14
      %vm335 = vcmp.le.s32.totalorder %v331, 14
      %v337 = vcombine.high %v304, %v304
      %338 = vrot.lane.b32.xlu0 %v304, 17
      %v339 = vpop.permute.xlu0 %338
      %340 = vrot.lane.b32.xlu0 %v337, 17
      %v341 = vpop.permute.xlu0 %340
      %vm342 = vcmask 138240
      %v343 = vsel %vm342, %v339, %v341
      %v346 = vsel %vm342, 0.0, %v339
      %v347 = vsel %vm332, 1, 0
      %v348 = vsel %vm333, 1, 0
      %vm349 = vcmp.eq.s32.totalorder %v347, 1
      %vm350 = vcmp.eq.s32.totalorder %v348, 1
      %v351 = vsel %vm349, %v346, 0.0
      %v352 = vsel %vm350, %v343, 0.0
      %353 = vrot.lane.b32.xlu0 %v304, 16
      %v354 = vpop.permute.xlu0 %353
      %355 = vrot.lane.b32.xlu0 %v337, 16
      %v356 = vpop.permute.xlu0 %355
      %vm357 = vcmask 130048
      %v358 = vsel %vm357, %v354, %v356
      %v360 = vsel %vm357, 0.0, %v354
      %361 = vrot.lane.b32.xlu0 %v304, 15
      %v362 = vpop.permute.xlu0 %361
      %363 = vrot.lane.b32.xlu0 %v337, 15
      %v364 = vpop.permute.xlu0 %363
      %vm365 = vcmask 121856
      %v366 = vsel %vm365, %v362, %v364
      %v369 = vsel %vm365, 0.0, %v362
      %v370 = vsel %vm334, 1, 0
      %v371 = vsel %vm335, 1, 0
      %vm372 = vcmp.eq.s32.totalorder %v370, 1
      %vm373 = vcmp.eq.s32.totalorder %v371, 1
      %v374 = vsel %vm372, %v369, 0.0
      %v375 = vsel %vm373, %v366, 0.0
      %376 = vrot.lane.b32.xlu0 %v304, 1
      %v377 = vpop.permute.xlu0 %376
      %378 = vrot.lane.b32.xlu0 %v337, 1
      %v379 = vpop.permute.xlu0 %378
      %vm380 = vcmask 7168
      %v381 = vsel %vm380, %v377, %v379
      %v384 = vsel %vm380, 0.0, %v377
      %v385 = vsel %vm349, %v384, 0.0
      %v386 = vsel %vm350, %v381, 0.0
      %387 = vrot.lane.b32.xlu0 %v304, 127
      %v388 = vpop.permute.xlu0 %387
      %389 = vrot.lane.b32.xlu0 %v337, 127
      %v390 = vpop.permute.xlu0 %389
      %vm391 = vcmask 1039360
      %v392 = vsel %vm391, %v388, %v390
      %v395 = vsel %vm391, %v390, 0.0
      %v396 = vsel %vm372, %v392, 0.0
      %v397 = vsel %vm373, %v395, 0.0
      %398 = vrot.lane.b32.xlu0 %v304, 113
      %v399 = vpop.permute.xlu0 %398
      %400 = vrot.lane.b32.xlu0 %v337, 113
      %v401 = vpop.permute.xlu0 %400
      %vm402 = vcmask 924672
      %v403 = vsel %vm402, %v399, %v401
      %v406 = vsel %vm402, %v401, 0.0
      %v407 = vsel %vm349, %v403, 0.0
      %v408 = vsel %vm350, %v406, 0.0
      %409 = vrot.lane.b32.xlu0 %v304, 112
      %v410 = vpop.permute.xlu0 %409
      %411 = vrot.lane.b32.xlu0 %v337, 112
      %v412 = vpop.permute.xlu0 %411
      %vm413 = vcmask 916480
      %v414 = vsel %vm413, %v410, %v412
      %v416 = vsel %vm413, %v412, 0.0
      %417 = vrot.lane.b32.xlu0 %v304, 111
      %v418 = vpop.permute.xlu0 %417
      %419 = vrot.lane.b32.xlu0 %v337, 111
      %v420 = vpop.permute.xlu0 %419
      %vm421 = vcmask 908288
      %v422 = vsel %vm421, %v418, %v420
      %v425 = vsel %vm421, %v420, 0.0
      %v426 = vsel %vm372, %v422, 0.0
      %v427 = vsel %vm373, %v425, 0.0
      %v429 = vrot.slane %v360, 4
      %v430 = vrot.slane %v358, 4
      %v435 = vrot.slane %v385, 4
      %v436 = vrot.slane %v386, 4
      %v442 = vrot.slane %v396, 4
      %v443 = vrot.slane %v397, 4
      %v447 = vrot.slane %v414, 4
      %v448 = vrot.slane %v416, 4
      %vm451 = vcmask 1043456
      %v452 = vsel %vm451, %v351, %v429
      %v453 = vsel %vm451, %v352, %v430
      %v454 = vsel %vm451, %v374, %v435
      %v455 = vsel %vm451, %v375, %v436
      %v456 = vsel %vm451, %v304, %v442
      %v457 = vsel %vm451, %v337, %v443
      %v458 = vsel %vm451, %v407, %v447
      %v459 = vsel %vm451, %v408, %v448
      %v460 = vpack.c.bf16 %v454, %v452
      %v461 = vpack.c.bf16 %v455, %v453
      %v462 = vpack.c.bf16 %v458, %v456
      %v463 = vpack.c.bf16 %v459, %v457
      %v464 = vpack.c.bf16 %v426, %v426
      %v465 = vpack.c.bf16 %v427, %v427
      %v466 = vld [vmem:[%s3] sm:$0x3]
      %vm467 = vcmask 293888
      %v469 = vsel %vm467, %v466, 0
      %vm471 = vcmask 1041408
      %v473 = vsel %vm471, %v464, 0
      %v476 = vsel %vm471, %v465, 0
      %478 = vmatprep.subr.bf16.mxu0 0
      %479 = vmatpush1.bf16.msra.mxu0 0
      %480 = vmatprep.subr.bf16.mxu0 0
      %481 = vmatpush1.bf16.msra.mxu0 0
      %482 = vmatprep.subr.bf16.mxu0 0
      %483 = vmatpush1.bf16.msra.mxu0 0
      %484 = vmatprep.subr.bf16.mxu0 0
      %485 = vmatpush1.bf16.msra.mxu0 0
      %486 = vmatprep.subr.bf16.mxu0 0
      %487 = vmatpush1.bf16.msra.mxu0 0
      %488 = vmatprep.subr.bf16.mxu0 %v476
      %489 = vmatpush1.bf16.msra.mxu0 %v473
      %490 = vmatprep.subr.bf16.mxu0 %v463
      %491 = vmatpush1.bf16.msra.mxu0 %v462
      %492 = vmatprep.subr.bf16.mxu0 %v461
      %493 = vmatpush1.bf16.msra.mxu0 %v460
      %494 = vmatprep.subr.bf16.mxu0 0
      %495 = vmatpush2.bf16.msra.mxu0 0
      %496 = vmatprep.subr.bf16.mxu0 0
      %497 = vmatpush2.bf16.msra.mxu0 0
      %498 = vmatprep.subr.bf16.mxu0 0
      %499 = vmatpush2.bf16.msra.mxu0 0
      %500 = vmatprep.subr.bf16.mxu0 0
      %501 = vmatpush2.bf16.msra.mxu0 0
      %502 = vmatprep.subr.bf16.mxu0 0
      %503 = vmatpush2.bf16.msra.mxu0 0
      %504 = vmatprep.subr.bf16.mxu0 0
      %505 = vmatpush2.bf16.msra.mxu0 0
      %506 = vmatprep.subr.bf16.mxu0 0
      %507 = vmatpush2.bf16.msra.mxu0 0
      %508 = vmatprep.subr.bf16.mxu0 0
      %509 = vmatpush2.bf16.msra.mxu0 0
      %510 = vmatprep.mubr.bf16.mxu0 0
      %511 = vmatmul.mubr.bf16.gmra.mxu0 %v469
      %v512 = vpop.f32.mrf.mxu0
      %v513 = vadd.f32 0.0, %v512
      %v514 = vpop.f32.mrf.mxu0
      %v515 = vadd.f32 0.0, %v514
      %v516 = vpop.f32.mrf.mxu0
      %v517 = vpop.f32.mrf.mxu0
      %518 = vdwg.mxu0
      %v519 = vpack.c.bf16 %v513, %v513
      %v520 = vpack.c.bf16 %v515, %v515
      %v523 = vcombine.low %v519, %v520
      %v525 = vunpack.c.l.s4 1983009808
      %v526 = vunpack.c.0.s8 %v525
      %v527 = vlaneseq
      %v528 = vshrl.u32 %v527, 7
      %v529 = vsub.s32 %v526, %v528
      %v530 = vrot.slane %v523, %v529
      %532 = vst [vmem:[%s264] sm:$0xf] %v530
      %v533 = vsel %vm451, %v513, 0.0
      %v534 = vsel %vm451, %v515, 0.0
      %v535 = vadd.f32 %v533, %v534
      %536 = vadd.xlane.f32.xlu0 %v535
      %v537 = vpop.xlane.xlu0 %536
      %vm538 = vcmask 3072
      %539 = vst.msk [vmem:[%s268] sm:$0xf] %vm538, %v537
      %v540 = vmul.f32 %v513, %v513
      %v541 = vmul.f32 %v515, %v515
      %v542 = vsel %vm451, %v540, 0.0
      %v543 = vsel %vm451, %v541, 0.0
      %v544 = vadd.f32 %v542, %v543
      %545 = vadd.xlane.f32.xlu0 %v544
      %v546 = vpop.xlane.xlu0 %545
      %547 = vst.msk [vmem:[%s272] sm:$0xf] %vm538, %v546
      %p548 = scmp.lt.s32.totalorder %s18, 1
      %s549 = scalar_select %p548, %s18, 1
      %s550 = smul.addr %s549, 2
      %s551 = smul.addr %s550, 2
      %s552 = scalar_lea.vmem %s4, %s551
      %p553 = scmp.lt.s32.totalorder %s18, 1
      %s554 = scalar_select %p553, %s18, 1
      %s555 = smul.addr %s554, 4
      %s556 = scalar_lea.vmem %s5, %s555
      %p557 = scmp.lt.s32.totalorder %s18, 1
      %s558 = scalar_select %p557, %s18, 1
      %s559 = smul.addr %s558, 4
      %s560 = scalar_lea.vmem %s6, %s559
      // Predicated region
      $region37: #{residual_block_nchw.3} parent=35 // pred_check
        %p561 = pneg %p125
      $region38: #{residual_block_nchw.3} parent=35 // pred_check_branch
        %563 = sbr.rel (%p561) target = $region40
      $region39: #{residual_block_nchw.3} parent=35 // pred_region
        _
      $region40: #{residual_block_nchw.3} parent=35 // pred_fallthru
        _
      // Predicated region
      $region41: #{residual_block_nchw.3} parent=35 // pred_check
        %p564 = pneg %p151
      $region42: #{residual_block_nchw.3} parent=35 // pred_check_branch
        %566 = sbr.rel (%p564) target = $region44
      $region43: #{residual_block_nchw.3} parent=35 // pred_region
        _
      $region44: #{residual_block_nchw.3} parent=35 // pred_fallthru
        _
      // Predicated region
      $region45: #{residual_block_nchw.3} parent=35 // pred_check
        %p567 = pneg %p177
      $region46: #{residual_block_nchw.3} parent=35 // pred_check_branch
        %569 = sbr.rel (%p567) target = $region48
      $region47: #{residual_block_nchw.3} parent=35 // pred_region
        _
      $region48: #{residual_block_nchw.3} parent=35 // pred_fallthru
        _
    $region36: #{residual_block_nchw.3} parent=5 // pred_fallthru
      _
    %p570 = scmp.le.s32.totalorder 2, %s13
    // Predicated region
    $region49: #{residual_block_nchw.3} parent=5 // pred_check
      %p571 = pneg %p570
    $region50: #{residual_block_nchw.3} parent=5 // pred_check_branch
      %573 = sbr.rel (%p571) target = $region52
    $region51: #{residual_block_nchw.3} parent=5 // pred_region
      %s574 = ssub.s32 %s13, 2
      // Predicated region
      $region53: #{residual_block_nchw.3} parent=51 // pred_check
        %p575 = pneg %p131
      $region54: #{residual_block_nchw.3} parent=51 // pred_check_branch
        %577 = sbr.rel (%p575) target = $region56
      $region55: #{residual_block_nchw.3} parent=51 // pred_region
        %p578 = scmp.lt.s32.totalorder %s19, 1
        %s579 = scalar_select %p578, %s19, 1
        %s580 = smul.addr %s579, 2
        %s581 = smul.addr %s580, 2
        %s582 = scalar_lea.vmem %s4, %s581
      $region56: #{residual_block_nchw.3} parent=51 // pred_fallthru
        _
      // Predicated region
      $region57: #{residual_block_nchw.3} parent=51 // pred_check
        %p583 = pneg %p157
      $region58: #{residual_block_nchw.3} parent=51 // pred_check_branch
        %585 = sbr.rel (%p583) target = $region60
      $region59: #{residual_block_nchw.3} parent=51 // pred_region
        %p586 = scmp.lt.s32.totalorder %s19, 1
        %s587 = scalar_select %p586, %s19, 1
        %s588 = smul.addr %s587, 4
        %s589 = scalar_lea.vmem %s5, %s588
      $region60: #{residual_block_nchw.3} parent=51 // pred_fallthru
        _
      // Predicated region
      $region61: #{residual_block_nchw.3} parent=51 // pred_check
        %p590 = pneg %p183
      $region62: #{residual_block_nchw.3} parent=51 // pred_check_branch
        %592 = sbr.rel (%p590) target = $region64
      $region63: #{residual_block_nchw.3} parent=51 // pred_region
        %p593 = scmp.lt.s32.totalorder %s19, 1
        %s594 = scalar_select %p593, %s19, 1
        %s595 = smul.addr %s594, 4
        %s596 = scalar_lea.vmem %s6, %s595
      $region64: #{residual_block_nchw.3} parent=51 // pred_fallthru
        _
    $region52: #{residual_block_nchw.3} parent=5 // pred_fallthru
      _
  $region6: #{residual_block_nchw.3} parent=0 // loop_footer
    %s17 = sadd.s32 1, %s13
  $region7: #{residual_block_nchw.3} parent=0 // loop_footer_branch
    %12 = sbr.rel target = $region3
  $region8: #{residual_block_nchw.3} parent=0 // loop_exit
    _

// kernel: residual_block_nchw.2
$region0: #{residual_block_nchw.2}
  #allocation0 [shape = 'u32[]', space=smem, size = 0x4, offset = 0x4, fixed_abs, tag = 'smem constant byte address 0x4 - core index']
  #allocation1 [shape = 'u32[144,128]{1,0:T(1,128)}', space=vmem, size = 0x12000, scoped, tag = 'internal scratch']
  %s0 = inlined_call_operand.vmem [shape: f32[2,4,256], index: 0, kind: input, shape index: {}]
  %s1 = inlined_call_operand.vmem [shape: f32[4,1], index: 1, kind: input, shape index: {}]
  %s2 = inlined_call_operand.vmem [shape: f32[4,1], index: 2, kind: input, shape index: {}]
  %s3 = inlined_call_operand.vmem [shape: bf16[4,36], index: 3, kind: input, shape index: {}]
  %s4 = inlined_call_operand.vmem [shape: bf16[2,4,256], index: 4, kind: output, shape index: {0}]
  %s5 = inlined_call_operand.vmem [shape: f32[2,4,1], index: 5, kind: output, shape index: {1}]
  %s6 = inlined_call_operand.vmem [shape: f32[2,4,1], index: 6, kind: output, shape index: {2}]
  %7 = xla_tuple %s4, %s5, %s6
  %s8 = sld [smem:[#allocation0]]
  $region65: #{residual_block_nchw.2} parent=0
    _
  %s10 = ssub.s32 1, %s8
  %s11 = scalar_select 0, %s10, %s8
  loop: start=0, step=1, limit=4
  $region2: #{residual_block_nchw.2} parent=0 // loop_pre_header
    _
  $region3: #{residual_block_nchw.2} parent=0 // loop_header
    %s13 = sphi 0, %s17
    %p14 = scmp.ge.s32.totalorder %s13, 4
    %s23 = sphi 0, %s25
    %s26 = sphi 0, %s23
    %s27 = sphi 0, %s26
    %s43 = sphi 0, %s27
    %s47 = sphi 0, %s47
    %s49 = sphi 0, %s47
    %s50 = sphi 0, %s49
    %s64 = sphi 0, %s50
    %s68 = sphi 0, %s68
    %s70 = sphi 0, %s68
    %s71 = sphi 0, %s70
    %s85 = sphi 0, %s71
    %s89 = sphi 0, %s89
    %s91 = sphi 0, %s89
    %s92 = sphi 0, %s91
    %s106 = sphi 0, %s92
    %s112 = sphi 0, %s114
    %s115 = sphi 0, %s112
    %s116 = sphi 0, %s115
    %s132 = sphi 0, %s116
    %s138 = sphi 0, %s140
    %s141 = sphi 0, %s138
    %s142 = sphi 0, %s141
    %s158 = sphi 0, %s142
    %s164 = sphi 0, %s166
    %s167 = sphi 0, %s164
    %s168 = sphi 0, %s167
    %s184 = sphi 0, %s168
  $region4: #{residual_block_nchw.2} parent=0 // loop_header_branch
    %16 = sbr.rel (%p14) target = $region8
  $region5: #{residual_block_nchw.2} parent=0 // loop_body
    %s18 = ssub.s32 %s13, 1
    %s19 = ssub.s32 %s13, 2
    %s20 = sadd.s32 %s13, 1
    %s21 = ssub.s32 %s13, %s20
    %p22 = scmp.eq.s32.totalorder %s21, 0
    %s24 = sadd.s32 %s23, 1
    %s25 = scalar_select %p22, %s23, %s24
    %p28 = pneg %p22
    %p29 = scmp.eq.s32.totalorder %s13, 1
    %p30 = por %p28, %p29
    %p31 = scmp.ne.s32.totalorder %s23, %s26
    %p32 = scmp.eq.s32.totalorder %s13, 0
    %p33 = por %p31, %p32
    %p34 = scmp.ne.s32.totalorder %s23, %s26
    %p35 = scmp.eq.s32.totalorder %s18, 1
    %p36 = por %p34, %p35
    %p37 = scmp.ne.s32.totalorder %s26, %s27
    %p38 = scmp.eq.s32.totalorder %s18, 0
    %p39 = por %p37, %p38
    %p40 = scmp.ne.s32.totalorder %s26, %s27
    %p41 = scmp.eq.s32.totalorder %s19, 1
    %p42 = por %p40, %p41
    %p44 = scmp.ne.s32.totalorder %s27, %s43
    %p45 = scmp.eq.s32.totalorder %s19, 0
    %p46 = por %p44, %p45
    %s48 = sadd.s32 %s47, 1
    %p51 = scmp.eq.s32.totalorder %s13, 1
    %p52 = scmp.ne.s32.totalorder %s47, %s49
    %p53 = scmp.eq.s32.totalorder %s13, 0
    %p54 = por %p52, %p53
    %p55 = scmp.ne.s32.totalorder %s47, %s49
    %p56 = scmp.eq.s32.totalorder %s18, 1
    %p57 = por %p55, %p56
    %p58 = scmp.ne.s32.totalorder %s49, %s50
    %p59 = scmp.eq.s32.totalorder %s18, 0
    %p60 = por %p58, %p59
    %p61 = scmp.ne.s32.totalorder %s49, %s50
    %p62 = scmp.eq.s32.totalorder %s19, 1
    %p63 = por %p61, %p62
    %p65 = scmp.ne.s32.totalorder %s50, %s64
    %p66 = scmp.eq.s32.totalorder %s19, 0
    %p67 = por %p65, %p66
    %s69 = sadd.s32 %s68, 1
    %p72 = scmp.eq.s32.totalorder %s13, 1
    %p73 = scmp.ne.s32.totalorder %s68, %s70
    %p74 = scmp.eq.s32.totalorder %s13, 0
    %p75 = por %p73, %p74
    %p76 = scmp.ne.s32.totalorder %s68, %s70
    %p77 = scmp.eq.s32.totalorder %s18, 1
    %p78 = por %p76, %p77
    %p79 = scmp.ne.s32.totalorder %s70, %s71
    %p80 = scmp.eq.s32.totalorder %s18, 0
    %p81 = por %p79, %p80
    %p82 = scmp.ne.s32.totalorder %s70, %s71
    %p83 = scmp.eq.s32.totalorder %s19, 1
    %p84 = por %p82, %p83
    %p86 = scmp.ne.s32.totalorder %s71, %s85
    %p87 = scmp.eq.s32.totalorder %s19, 0
    %p88 = por %p86, %p87
    %s90 = sadd.s32 %s89, 1
    %p93 = scmp.eq.s32.totalorder %s13, 1
    %p94 = scmp.ne.s32.totalorder %s89, %s91
    %p95 = scmp.eq.s32.totalorder %s13, 0
    %p96 = por %p94, %p95
    %p97 = scmp.ne.s32.totalorder %s89, %s91
    %p98 = scmp.eq.s32.totalorder %s18, 1
    %p99 = por %p97, %p98
    %p100 = scmp.ne.s32.totalorder %s91, %s92
    %p101 = scmp.eq.s32.totalorder %s18, 0
    %p102 = por %p100, %p101
    %p103 = scmp.ne.s32.totalorder %s91, %s92
    %p104 = scmp.eq.s32.totalorder %s19, 1
    %p105 = por %p103, %p104
    %p107 = scmp.ne.s32.totalorder %s92, %s106
    %p108 = scmp.eq.s32.totalorder %s19, 0
    %p109 = por %p107, %p108
    %s110 = ssub.s32 %s13, %s20
    %p111 = scmp.eq.s32.totalorder %s110, 0
    %s113 = sadd.s32 %s112, 1
    %s114 = scalar_select %p111, %s112, %s113
    %p117 = pneg %p111
    %p118 = scmp.eq.s32.totalorder %s13, 1
    %p119 = por %p117, %p118
    %p120 = scmp.ne.s32.totalorder %s112, %s115
    %p121 = scmp.eq.s32.totalorder %s13, 0
    %p122 = por %p120, %p121
    %p123 = scmp.ne.s32.totalorder %s112, %s115
    %p124 = scmp.eq.s32.totalorder %s18, 1
    %p125 = por %p123, %p124
    %p126 = scmp.ne.s32.totalorder %s115, %s116
    %p127 = scmp.eq.s32.totalorder %s18, 0
    %p128 = por %p126, %p127
    %p129 = scmp.ne.s32.totalorder %s115, %s116
    %p130 = scmp.eq.s32.totalorder %s19, 1
    %p131 = por %p129, %p130
    %p133 = scmp.ne.s32.totalorder %s116, %s132
    %p134 = scmp.eq.s32.totalorder %s19, 0
    %p135 = por %p133, %p134
    %s136 = ssub.s32 %s13, %s20
    %p137 = scmp.eq.s32.totalorder %s136, 0
    %s139 = sadd.s32 %s138, 1
    %s140 = scalar_select %p137, %s138, %s139
    %p143 = pneg %p137
    %p144 = scmp.eq.s32.totalorder %s13, 1
    %p145 = por %p143, %p144
    %p146 = scmp.ne.s32.totalorder %s138, %s141
    %p147 = scmp.eq.s32.totalorder %s13, 0
    %p148 = por %p146, %p147
    %p149 = scmp.ne.s32.totalorder %s138, %s141
    %p150 = scmp.eq.s32.totalorder %s18, 1
    %p151 = por %p149, %p150
    %p152 = scmp.ne.s32.totalorder %s141, %s142
    %p153 = scmp.eq.s32.totalorder %s18, 0
    %p154 = por %p152, %p153
    %p155 = scmp.ne.s32.totalorder %s141, %s142
    %p156 = scmp.eq.s32.totalorder %s19, 1
    %p157 = por %p155, %p156
    %p159 = scmp.ne.s32.totalorder %s142, %s158
    %p160 = scmp.eq.s32.totalorder %s19, 0
    %p161 = por %p159, %p160
    %s162 = ssub.s32 %s13, %s20
    %p163 = scmp.eq.s32.totalorder %s162, 0
    %s165 = sadd.s32 %s164, 1
    %s166 = scalar_select %p163, %s164, %s165
    %p169 = pneg %p163
    %p170 = scmp.eq.s32.totalorder %s13, 1
    %p171 = por %p169, %p170
    %p172 = scmp.ne.s32.totalorder %s164, %s167
    %p173 = scmp.eq.s32.totalorder %s13, 0
    %p174 = por %p172, %p173
    %p175 = scmp.ne.s32.totalorder %s164, %s167
    %p176 = scmp.eq.s32.totalorder %s18, 1
    %p177 = por %p175, %p176
    %p178 = scmp.ne.s32.totalorder %s167, %s168
    %p179 = scmp.eq.s32.totalorder %s18, 0
    %p180 = por %p178, %p179
    %p181 = scmp.ne.s32.totalorder %s167, %s168
    %p182 = scmp.eq.s32.totalorder %s19, 1
    %p183 = por %p181, %p182
    %p185 = scmp.ne.s32.totalorder %s168, %s184
    %p186 = scmp.eq.s32.totalorder %s19, 0
    %p187 = por %p185, %p186
    %p188 = scmp.le.s32.totalorder 1, %s13
    %p189 = scmp.lt.s32.totalorder %s13, 3
    %p190 = pnand %p188, %p189
    %p191 = pneg %p190
    // Predicated region
    $region9: #{residual_block_nchw.2} parent=5 // pred_check
      _
    $region10: #{residual_block_nchw.2} parent=5 // pred_check_branch
      %193 = sbr.rel (%p190) target = $region12
    $region11: #{residual_block_nchw.2} parent=5 // pred_region
      %s194 = ssub.s32 %s13, 1
      // Predicated region
      $region13: #{residual_block_nchw.2} parent=11 // pred_check
        %p195 = pneg %p60
      $region14: #{residual_block_nchw.2} parent=11 // pred_check_branch
        %197 = sbr.rel (%p195) target = $region16
      $region15: #{residual_block_nchw.2} parent=11 // pred_region
        _
      $region16: #{residual_block_nchw.2} parent=11 // pred_fallthru
        _
      // Predicated region
      $region17: #{residual_block_nchw.2} parent=11 // pred_check
        %p198 = pneg %p81
      $region18: #{residual_block_nchw.2} parent=11 // pred_check_branch
        %200 = sbr.rel (%p198) target = $region20
      $region19: #{residual_block_nchw.2} parent=11 // pred_region
        _
      $region20: #{residual_block_nchw.2} parent=11 // pred_fallthru
        _
      // Predicated region
      $region21: #{residual_block_nchw.2} parent=11 // pred_check
        %p201 = pneg %p102
      $region22: #{residual_block_nchw.2} parent=11 // pred_check_branch
        %203 = sbr.rel (%p201) target = $region24
      $region23: #{residual_block_nchw.2} parent=11 // pred_region
        _
      $region24: #{residual_block_nchw.2} parent=11 // pred_fallthru
        _
    $region12: #{residual_block_nchw.2} parent=5 // pred_fallthru
      _
    %p204 = scmp.lt.s32.totalorder %s13, 2
    // Predicated region
    $region25: #{residual_block_nchw.2} parent=5 // pred_check
      %p205 = pneg %p204
    $region26: #{residual_block_nchw.2} parent=5 // pred_check_branch
      %207 = sbr.rel (%p205) target = $region28
    $region27: #{residual_block_nchw.2} parent=5 // pred_region
      // Predicated region
      $region29: #{residual_block_nchw.2} parent=27 // pred_check
        %p208 = pneg %p33
      $region30: #{residual_block_nchw.2} parent=27 // pred_check_branch
        %210 = sbr.rel (%p208) target = $region32
      $region31: #{residual_block_nchw.2} parent=27 // pred_region
        %p211 = scmp.lt.s32.totalorder %s13, 1
        %s212 = scalar_select %p211, %s13, 1
        %s213 = smul.addr %s212, 2
        %s214 = smul.addr %s213, 4
        %s215 = scalar_lea.vmem %s0, %s214
      $region32: #{residual_block_nchw.2} parent=27 // pred_fallthru
        _
    $region28: #{residual_block_nchw.2} parent=5 // pred_fallthru
      _
    %p216 = scmp.le.s32.totalorder 1, %s13
    %p217 = scmp.lt.s32.totalorder %s13, 3
    %p218 = pnand %p216, %p217
    %p219 = pneg %p218
    // Predicated region
    $region33: #{residual_block_nchw.2} parent=5 // pred_check
      _
    $region34: #{residual_block_nchw.2} parent=5 // pred_check_branch
      %221 = sbr.rel (%p218) target = $region36
    $region35: #{residual_block_nchw.2} parent=5 // pred_region
      %s222 = ssub.s32 %s13, 1
      %p223 = scmp.lt.s32.totalorder %s18, 1
      %s224 = scalar_select %p223, %s18, 1
      %s225 = smul.addr %s224, 2
      %s226 = smul.addr %s225, 4
      %s227 = scalar_lea.vmem %s0, %s226
      %p228 = pneg %p39
      %p229 = pneg %p36
      %p230 = pneg %p60
      %p231 = pneg %p57
      %p232 = pneg %p81
      %p233 = pneg %p78
      %p234 = pneg %p102
      %p235 = pneg %p99
      %p236 = pneg %p128
      %p237 = pneg %p125
      %p238 = scmp.lt.s32.totalorder %s18, 1
      %s239 = scalar_select %p238, %s18, 1
      %s240 = smul.addr %s239, 2
      %s241 = smul.addr %s240, 2
      %s242 = scalar_lea.vmem %s4, %s241
      %p243 = pneg %p154
      %p244 = pneg %p151
      %p245 = scmp.lt.s32.totalorder %s18, 1
      %s246 = scalar_select %p245, %s18, 1
      %s247 = smul.addr %s246, 4
      %s248 = scalar_lea.vmem %s5, %s247
      %p249 = pneg %p180
      %p250 = pneg %p177
      %p251 = scmp.lt.s32.totalorder %s18, 1
      %s252 = scalar_select %p251, %s18, 1
      %s253 = smul.addr %s252, 4
      %s254 = scalar_lea.vmem %s6, %s253
      %p255 = scmp.lt.s32.totalorder %s18, 1
      %s256 = scalar_select %p255, %s18, 1
      %s257 = smul.addr %s256, 2
      %s258 = smul.addr %s257, 4
      %s259 = scalar_lea.vmem %s0, %s258
      %p260 = scmp.lt.s32.totalorder %s18, 1
      %s261 = scalar_select %p260, %s18, 1
      %s262 = smul.addr %s261, 2
      %s263 = smul.addr %s262, 2
      %s264 = scalar_lea.vmem %s4, %s263
      %p265 = scmp.lt.s32.totalorder %s18, 1
      %s266 = scalar_select %p265, %s18, 1
      %s267 = smul.addr %s266, 4
      %s268 = scalar_lea.vmem %s5, %s267
      %p269 = scmp.lt.s32.totalorder %s18, 1
      %s270 = scalar_select %p269, %s18, 1
      %s271 = smul.addr %s270, 4
      %s272 = scalar_lea.vmem %s6, %s271
      %v274 = vld [vmem:[%s259] sm:$0xff]
      %v275 = vld [vmem:[%s1] sm:$0xf]
      %277 = vset.pattern.permute.xlu0 0
      %278 = vperm.xlu0 %277, %v275
      %v279 = vpop.permute.xlu0 %278
      %v281 = vunpack.c.l.s4 839922192
      %v282 = vunpack.c.0.s8 %v281
      %v283 = vlaneseq
      %v284 = vshrl.u32 %v283, 7
      %v285 = vsub.s32 %v282, %v284
      %v286 = vrot.slane %v279, %v285
      %v288 = vmul.f32 %v274, %v286
      %v289 = vld [vmem:[%s2] sm:$0xf]
      %291 = vset.pattern.permute.xlu0 0
      %292 = vperm.xlu0 %291, %v289
      %v293 = vpop.permute.xlu0 %292
      %v295 = vunpack.c.l.s4 839922192
      %v296 = vunpack.c.0.s8 %v295
      %v297 = vlaneseq
      %v298 = vshrl.u32 %v297, 7
      %v299 = vsub.s32 %v296, %v298
      %v300 = vrot.slane %v293, %v299
      %v302 = vadd.f32 %v288, %v300
      %v303 = vlaneseq
      %v304 = vand.u32 %v303, 127
      %v305 = vadd.s32 %v304, 128
      %vm306 = vcmp.lt.s32.totalorder %v304, 0
      %v307 = vsub.s32 0, %v304
      %v308 = vsel %vm306, %v307, %v304
      %v309 = vshrl.u32 %v308, 4
      %v310 = vand.u32 %v308, 15
      %v311 = vsub.s32 0, %v310
      %v312 = vsel %vm306, %v311, %v310
      %vm313 = vcmp.lt.s32.totalorder %v305, 0
      %v314 = vsub.s32 0, %v305
      %v315 = vsel %vm313, %v314, %v305
      %v316 = vshrl.u32 %v315, 4
      %v317 = vand.u32 %v315, 15
      %v318 = vsub.s32 0, %v317
      %v319 = vsel %vm313, %v318, %v317
      %vm320 = vcmp.ne.s32.totalorder %v312, 0
      %vm321 = vcmp.ne.s32.totalorder %v319, 0
      %vm322 = vcmp.lt.s32.totalorder %v312, 0
      %vm323 = vcmp.lt.s32.totalorder %v319, 0
      %vm324 = vmand %vm322, %vm320
      %vm325 = vmand %vm323, %vm321
      %v326 = vadd.s32 %v312, 16
      %v327 = vadd.s32 %v319, 16
      %v328 = vsel %vm324, %v326, %v312
      %v329 = vsel %vm325, %v327, %v319
      %vm330 = vcmp.ge.s32.totalorder %v328, 1
      %vm331 = vcmp.ge.s32.totalorder %v329, 1
      %vm332 = vcmp.le.s32.totalorder %v328, 14
      %vm333 = vcmp.le.s32.totalorder %v329, 14
      %v335 = vcombine.high %v302, %v302
      %336 = vrot.lane.b32.xlu0 %v302, 17
      %v337 = vpop.permute.xlu0 %336
      %338 = vrot.lane.b32.xlu0 %v335, 17
      %v339 = vpop.permute.xlu0 %338
      %vm340 = vcmask 138240
      %v341 = vsel %vm340, %v337, %v339
      %v344 = vsel %vm340, 0.0, %v337
      %v345 = vsel %vm330, 1, 0
      %v346 = vsel %vm331, 1, 0
      %vm347 = vcmp.eq.s32.totalorder %v345, 1
      %vm348 = vcmp.eq.s32.totalorder %v346, 1
      %v349 = vsel %vm347, %v344, 0.0
      %v350 = vsel %vm348, %v341, 0.0
      %351 = vrot.lane.b32.xlu0 %v302, 16
      %v352 = vpop.permute.xlu0 %351
      %353 = vrot.lane.b32.xlu0 %v335, 16
      %v354 = vpop.permute.xlu0 %353
      %vm355 = vcmask 130048
      %v356 = vsel %vm355, %v352, %v354
      %v358 = vsel %vm355, 0.0, %v352
      %359 = vrot.lane.b32.xlu0 %v302, 15
      %v360 = vpop.permute.xlu0 %359
      %361 = vrot.lane.b32.xlu0 %v335, 15
      %v362 = vpop.permute.xlu0 %361
      %vm363 = vcmask 121856
      %v364 = vsel %vm363, %v360, %v362
      %v367 = vsel %vm363, 0.0, %v360
      %v368 = vsel %vm332, 1, 0
      %v369 = vsel %vm333, 1, 0
      %vm370 = vcmp.eq.s32.totalorder %v368, 1
      %vm371 = vcmp.eq.s32.totalorder %v369, 1
      %v372 = vsel %vm370, %v367, 0.0
      %v373 = vsel %vm371, %v364, 0.0
      %374 = vrot.lane.b32.xlu0 %v302, 1
      %v375 = vpop.permute.xlu0 %374
      %376 = vrot.lane.b32.xlu0 %v335, 1
      %v377 = vpop.permute.xlu0 %376
      %vm378 = vcmask 7168
      %v379 = vsel %vm378, %v375, %v377
      %v382 = vsel %vm378, 0.0, %v375
      %v383 = vsel %vm347, %v382, 0.0
      %v384 = vsel %vm348, %v379, 0.0
      %385 = vrot.lane.b32.xlu0 %v302, 127
      %v386 = vpop.permute.xlu0 %385
      %387 = vrot.lane.b32.xlu0 %v335, 127
      %v388 = vpop.permute.xlu0 %387
      %vm389 = vcmask 1039360
      %v390 = vsel %vm389, %v386, %v388
      %v393 = vsel %vm389, %v388, 0.0
      %v394 = vsel %vm370, %v390, 0.0
      %v395 = vsel %vm371, %v393, 0.0
      %396 = vrot.lane.b32.xlu0 %v302, 113
      %v397 = vpop.permute.xlu0 %396
      %398 = vrot.lane.b32.xlu0 %v335, 113
      %v399 = vpop.permute.xlu0 %398
      %vm400 = vcmask 924672
      %v401 = vsel %vm400, %v397, %v399
      %v404 = vsel %vm400, %v399, 0.0
      %v405 = vsel %vm347, %v401, 0.0
      %v406 = vsel %vm348, %v404, 0.0
      %407 = vrot.lane.b32.xlu0 %v302, 112
      %v408 = vpop.permute.xlu0 %407
      %409 = vrot.lane.b32.xlu0 %v335, 112
      %v410 = vpop.permute.xlu0 %409
      %vm411 = vcmask 916480
      %v412 = vsel %vm411, %v408, %v410
      %v414 = vsel %vm411, %v410, 0.0
      %415 = vrot.lane.b32.xlu0 %v302, 111
      %v416 = vpop.permute.xlu0 %415
      %417 = vrot.lane.b32.xlu0 %v335, 111
      %v418 = vpop.permute.xlu0 %417
      %vm419 = vcmask 908288
      %v420 = vsel %vm419, %v416, %v418
      %v423 = vsel %vm419, %v418, 0.0
      %v424 = vsel %vm370, %v420, 0.0
      %v425 = vsel %vm371, %v423, 0.0
      %v427 = vrot.slane %v358, 4
      %v428 = vrot.slane %v356, 4
      %v433 = vrot.slane %v383, 4
      %v434 = vrot.slane %v384, 4
      %v440 = vrot.slane %v394, 4
      %v441 = vrot.slane %v395, 4
      %v445 = vrot.slane %v412, 4
      %v446 = vrot.slane %v414, 4
      %vm449 = vcmask 1043456
      %v450 = vsel %vm449, %v349, %v427
      %v451 = vsel %vm449, %v350, %v428
      %v452 = vsel %vm449, %v372, %v433
      %v453 = vsel %vm449, %v373, %v434
      %v454 = vsel %vm449, %v302, %v440
      %v455 = vsel %vm449, %v335, %v441
      %v456 = vsel %vm449, %v405, %v445
      %v457 = vsel %vm449, %v406, %v446
      %v458 = vpack.c.bf16 %v452, %v450
      %v459 = vpack.c.bf16 %v453, %v451
      %v460 = vpack.c.bf16 %v456, %v454
      %v461 = vpack.c.bf16 %v457, %v455
      %v462 = vpack.c.bf16 %v424, %v424
      %v463 = vpack.c.bf16 %v425, %v425
      %v464 = vld [vmem:[%s3] sm:$0x3]
      %vm465 = vcmask 293888
      %v467 = vsel %vm465, %v464, 0
      %vm469 = vcmask 1041408
      %v471 = vsel %vm469, %v462, 0
      %v474 = vsel %vm469, %v463, 0
      %476 = vmatprep.subr.bf16.mxu0 0
      %477 = vmatpush1.bf16.msra.mxu0 0
      %478 = vmatprep.subr.bf16.mxu0 0
      %479 = vmatpush1.bf16.msra.mxu0 0
      %480 = vmatprep.subr.bf16.mxu0 0
      %481 = vmatpush1.bf16.msra.mxu0 0
      %482 = vmatprep.subr.bf16.mxu0 0
      %483 = vmatpush1.bf16.msra.mxu0 0
      %484 = vmatprep.subr.bf16.mxu0 0
      %485 = vmatpush1.bf16.msra.mxu0 0
      %486 = vmatprep.subr.bf16.mxu0 %v474
      %487 = vmatpush1.bf16.msra.mxu0 %v471
      %488 = vmatprep.subr.bf16.mxu0 %v461
      %489 = vmatpush1.bf16.msra.mxu0 %v460
      %490 = vmatprep.subr.bf16.mxu0 %v459
      %491 = vmatpush1.bf16.msra.mxu0 %v458
      %492 = vmatprep.subr.bf16.mxu0 0
      %493 = vmatpush2.bf16.msra.mxu0 0
      %494 = vmatprep.subr.bf16.mxu0 0
      %495 = vmatpush2.bf16.msra.mxu0 0
      %496 = vmatprep.subr.bf16.mxu0 0
      %497 = vmatpush2.bf16.msra.mxu0 0
      %498 = vmatprep.subr.bf16.mxu0 0
      %499 = vmatpush2.bf16.msra.mxu0 0
      %500 = vmatprep.subr.bf16.mxu0 0
      %501 = vmatpush2.bf16.msra.mxu0 0
      %502 = vmatprep.subr.bf16.mxu0 0
      %503 = vmatpush2.bf16.msra.mxu0 0
      %504 = vmatprep.subr.bf16.mxu0 0
      %505 = vmatpush2.bf16.msra.mxu0 0
      %506 = vmatprep.subr.bf16.mxu0 0
      %507 = vmatpush2.bf16.msra.mxu0 0
      %508 = vmatprep.mubr.bf16.mxu0 0
      %509 = vmatmul.mubr.bf16.gmra.mxu0 %v467
      %v510 = vpop.f32.mrf.mxu0
      %v511 = vadd.f32 0.0, %v510
      %v512 = vpop.f32.mrf.mxu0
      %v513 = vadd.f32 0.0, %v512
      %v514 = vpop.f32.mrf.mxu0
      %v515 = vpop.f32.mrf.mxu0
      %516 = vdwg.mxu0
      %v517 = vpack.c.bf16 %v511, %v511
      %v518 = vpack.c.bf16 %v513, %v513
      %v521 = vcombine.low %v517, %v518
      %v523 = vunpack.c.l.s4 1983009808
      %v524 = vunpack.c.0.s8 %v523
      %v525 = vlaneseq
      %v526 = vshrl.u32 %v525, 7
      %v527 = vsub.s32 %v524, %v526
      %v528 = vrot.slane %v521, %v527
      %530 = vst [vmem:[%s264] sm:$0xf] %v528
      %v531 = vsel %vm449, %v511, 0.0
      %v532 = vsel %vm449, %v513, 0.0
      %v533 = vadd.f32 %v531, %v532
      %534 = vadd.xlane.f32.xlu0 %v533
      %v535 = vpop.xlane.xlu0 %534
      %vm536 = vcmask 3072
      %537 = vst.msk [vmem:[%s268] sm:$0xf] %vm536, %v535
      %v538 = vmul.f32 %v511, %v511
      %v539 = vmul.f32 %v513, %v513
      %v540 = vsel %vm449, %v538, 0.0
      %v541 = vsel %vm449, %v539, 0.0
      %v542 = vadd.f32 %v540, %v541
      %543 = vadd.xlane.f32.xlu0 %v542
      %v544 = vpop.xlane.xlu0 %543
      %545 = vst.msk [vmem:[%s272] sm:$0xf] %vm536, %v544
      %p546 = scmp.lt.s32.totalorder %s18, 1
      %s547 = scalar_select %p546, %s18, 1
      %s548 = smul.addr %s547, 2
      %s549 = smul.addr %s548, 2
      %s550 = scalar_lea.vmem %s4, %s549
      %p551 = scmp.lt.s32.totalorder %s18, 1
      %s552 = scalar_select %p551, %s18, 1
      %s553 = smul.addr %s552, 4
      %s554 = scalar_lea.vmem %s5, %s553
      %p555 = scmp.lt.s32.totalorder %s18, 1
      %s556 = scalar_select %p555, %s18, 1
      %s557 = smul.addr %s556, 4
      %s558 = scalar_lea.vmem %s6, %s557
      // Predicated region
      $region37: #{residual_block_nchw.2} parent=35 // pred_check
        %p559 = pneg %p125
      $region38: #{residual_block_nchw.2} parent=35 // pred_check_branch
        %561 = sbr.rel (%p559) target = $region40
      $region39: #{residual_block_nchw.2} parent=35 // pred_region
        _
      $region40: #{residual_block_nchw.2} parent=35 // pred_fallthru
        _
      // Predicated region
      $region41: #{residual_block_nchw.2} parent=35 // pred_check
        %p562 = pneg %p151
      $region42: #{residual_block_nchw.2} parent=35 // pred_check_branch
        %564 = sbr.rel (%p562) target = $region44
      $region43: #{residual_block_nchw.2} parent=35 // pred_region
        _
      $region44: #{residual_block_nchw.2} parent=35 // pred_fallthru
        _
      // Predicated region
      $region45: #{residual_block_nchw.2} parent=35 // pred_check
        %p565 = pneg %p177
      $region46: #{residual_block_nchw.2} parent=35 // pred_check_branch
        %567 = sbr.rel (%p565) target = $region48
      $region47: #{residual_block_nchw.2} parent=35 // pred_region
        _
      $region48: #{residual_block_nchw.2} parent=35 // pred_fallthru
        _
    $region36: #{residual_block_nchw.2} parent=5 // pred_fallthru
      _
    %p568 = scmp.le.s32.totalorder 2, %s13
    // Predicated region
    $region49: #{residual_block_nchw.2} parent=5 // pred_check
      %p569 = pneg %p568
    $region50: #{residual_block_nchw.2} parent=5 // pred_check_branch
      %571 = sbr.rel (%p569) target = $region52
    $region51: #{residual_block_nchw.2} parent=5 // pred_region
      %s572 = ssub.s32 %s13, 2
      // Predicated region
      $region53: #{residual_block_nchw.2} parent=51 // pred_check
        %p573 = pneg %p131
      $region54: #{residual_block_nchw.2} parent=51 // pred_check_branch
        %575 = sbr.rel (%p573) target = $region56
      $region55: #{residual_block_nchw.2} parent=51 // pred_region
        %p576 = scmp.lt.s32.totalorder %s19, 1
        %s577 = scalar_select %p576, %s19, 1
        %s578 = smul.addr %s577, 2
        %s579 = smul.addr %s578, 2
        %s580 = scalar_lea.vmem %s4, %s579
      $region56: #{residual_block_nchw.2} parent=51 // pred_fallthru
        _
      // Predicated region
      $region57: #{residual_block_nchw.2} parent=51 // pred_check
        %p581 = pneg %p157
      $region58: #{residual_block_nchw.2} parent=51 // pred_check_branch
        %583 = sbr.rel (%p581) target = $region60
      $region59: #{residual_block_nchw.2} parent=51 // pred_region
        %p584 = scmp.lt.s32.totalorder %s19, 1
        %s585 = scalar_select %p584, %s19, 1
        %s586 = smul.addr %s585, 4
        %s587 = scalar_lea.vmem %s5, %s586
      $region60: #{residual_block_nchw.2} parent=51 // pred_fallthru
        _
      // Predicated region
      $region61: #{residual_block_nchw.2} parent=51 // pred_check
        %p588 = pneg %p183
      $region62: #{residual_block_nchw.2} parent=51 // pred_check_branch
        %590 = sbr.rel (%p588) target = $region64
      $region63: #{residual_block_nchw.2} parent=51 // pred_region
        %p591 = scmp.lt.s32.totalorder %s19, 1
        %s592 = scalar_select %p591, %s19, 1
        %s593 = smul.addr %s592, 4
        %s594 = scalar_lea.vmem %s6, %s593
      $region64: #{residual_block_nchw.2} parent=51 // pred_fallthru
        _
    $region52: #{residual_block_nchw.2} parent=5 // pred_fallthru
      _
  $region6: #{residual_block_nchw.2} parent=0 // loop_footer
    %s17 = sadd.s32 1, %s13
  $region7: #{residual_block_nchw.2} parent=0 // loop_footer_branch
    %12 = sbr.rel target = $region3
  $region8: #{residual_block_nchw.2} parent=0 // loop_exit
    _

</llo_original>
